<compile_context>
chip_gen: v7x
topology: tpu7x:2x2x1
jax: 0.10.0
libtpu: 0.0.40
codegen_flags: <defaults>
</compile_context>

<pallas_src>
import functools

import jax
import jax.numpy as jnp
from jax import lax
from jax.experimental import pallas as pl
from jax.experimental.pallas import tpu as pltpu


def _mod(v, m):
    """v % m, strength-reduced to & when m is a power of two."""
    return (v & (m - 1)) if (m & (m - 1)) == 0 else (v % m)


def _res_truck_kernel(x_ref, w_ref, o_ref, patches_ref, *, H, W, C,
                      img_per_step, num_blocks, layers_per_block):
    """One grid step = `img_per_step` images folded along lanes.

    x_ref:       (C, LANES)      activation, images concatenated along lanes
    w_ref:       (L*C, KP)       per-layer im2col weights, bias folded at col 9C
    o_ref:       (C, LANES)
    patches_ref: (KP, LANES)     VMEM scratch for the im2col patch matrix
    """
    HW = H * W
    LANES = img_per_step * HW
    KP = patches_ref.shape[0]                    # 9*C + 1 (bias row), padded to %8

    act = x_ref[...].astype(jnp.float32)         # (C, LANES)

    # --- elementary boundary masks ('zero' padding), per-image spatial index ---
    col = lax.broadcasted_iota(jnp.int32, (C, LANES), 1)
    p = _mod(col, HW)                            # flat spatial index within image
    ww = _mod(col, W)                            # column within row
    m_up = p >= W                                # row above exists
    m_down = p < HW - W                          # row below exists
    m_left = ww >= 1                             # column to the left exists
    m_right = ww < W - 1                         # column to the right exists

    def lane_shift(a, s):
        # out[j] = a[(j + s) % LANES]; every wrapped / cross-image read is
        # zeroed by the masks, so the circular rotate is safe.
        return pltpu.roll(a, shift=(-s) % LANES, axis=1)

    # --- constant tail of the patch matrix: ones row (bias) + zero pad rows ---
    tail = KP - 9 * C                            # >= 1; row 9*C multiplies the bias
    row_id = lax.broadcasted_iota(jnp.int32, (tail, LANES), 0)
    patches_ref[9 * C:KP, :] = (row_id == 0).astype(jnp.float32)

    def conv3x3(a, li):
        # Build the 9 tap slabs directly into VMEM scratch (sublane-aligned
        # offsets, multiples of C=8).  Row shifts are masked first, column
        # shifts are derived from the already-masked row copies.
        t = 0
        for rh, rmask in ((-1, m_up), (0, None), (1, m_down)):
            r = lane_shift(a, rh * W) if rh != 0 else a
            if rmask is not None:
                r = jnp.where(rmask, r, 0.0)
            for rw, cmask in ((-1, m_left), (0, None), (1, m_right)):
                s = lane_shift(r, rw) if rw != 0 else r
                if cmask is not None:
                    s = jnp.where(cmask, s, 0.0)
                patches_ref[t * C:(t + 1) * C, :] = s
                t += 1
        w_mat = w_ref[li * C:(li + 1) * C, :]    # (C, KP), bias folded in
        # Single im2col matmul (bias included): (C, KP) x (KP, LANES).
        return jnp.dot(w_mat, patches_ref[...],
                       preferred_element_type=jnp.float32)

    li = 0
    for _ in range(num_blocks):                  # ResCNA blocks
        res_in = act
        t = act
        for m in range(layers_per_block):
            y = conv3x3(t, li)
            li += 1
            if m + 1 < layers_per_block:
                t = jnp.maximum(y, 0.0)          # conv + ReLU
            else:
                act = jnp.maximum(res_in + y, 0.0)   # relu(x + residual)

    o_ref[...] = act.astype(o_ref.dtype)


def prepack_params(truck_params):
    """Run ONCE at parameter-load time (hoisted out of the jitted forward).

    Converts each Conv2d (OIHW) weight to its (C, 9C) im2col matrix with the
    tap-major / channel-minor row order used in the kernel, folds the bias in
    as an extra column at index 9C, pads K to a multiple of 8, and stacks all
    layers along sublanes -> (L*C, KP)."""
    C = truck_params[0][0][0].shape[0]
    KP = ((9 * C + 1 + 7) // 8) * 8
    rows = []
    for block in truck_params:
        for (w, b) in block:
            wm = jnp.transpose(w, (0, 2, 3, 1)).reshape(C, 9 * C)
            pad = jnp.zeros((C, KP - 9 * C - 1), jnp.float32)
            rows.append(jnp.concatenate(
                [wm, b.reshape(C, 1).astype(jnp.float32), pad], axis=1))
    return jnp.concatenate(rows, axis=0)         # (L*C, KP)


@functools.partial(jax.jit,
                   static_argnames=("num_blocks", "layers_per_block",
                                    "lane_groups"))
def res_truck_forward(x_nchw, w_packed, *, num_blocks, layers_per_block,
                      lane_groups=1):
    """ResTruck forward.  Input/output NCHW (PyTorch convention).

    lane_groups: number of grid steps; each step processes N/lane_groups
    images folded along the lane dimension.  Use 1 on v5e/v6e (single TC);
    2 on v7x for larger batches so both TensorCores stay busy."""
    N, C, H, W = x_nchw.shape
    HW = H * W
    G = lane_groups
    assert N % G == 0, "batch must be divisible by lane_groups"
    img_per_step = N // G
    LANES = img_per_step * HW
    KP = w_packed.shape[1]
    L = num_blocks * layers_per_block

    # Fold images along lanes: (N, C, H, W) -> (G, C, img_per_step*HW).
    x_folded = (x_nchw.reshape(G, img_per_step, C, HW)
                .transpose(0, 2, 1, 3)
                .reshape(G, C, LANES))

    kernel = functools.partial(
        _res_truck_kernel, H=H, W=W, C=C, img_per_step=img_per_step,
        num_blocks=num_blocks, layers_per_block=layers_per_block)

    out = pl.pallas_call(
        kernel,
        out_shape=jax.ShapeDtypeStruct((G, C, LANES), x_nchw.dtype),
        grid=(G,),
        in_specs=[
            pl.BlockSpec((None, C, LANES), lambda g: (g, 0, 0)),
            pl.BlockSpec((L * C, KP), lambda g: (0, 0)),
        ],
        out_specs=pl.BlockSpec((None, C, LANES), lambda g: (g, 0, 0)),
        scratch_shapes=[pltpu.VMEM((KP, LANES), jnp.float32)],
        compiler_params=pltpu.CompilerParams(
            dimension_semantics=("parallel",)),
    )(x_folded, w_packed)

    return (out.reshape(G, C, img_per_step, HW)
            .transpose(0, 2, 1, 3)
            .reshape(N, C, H, W))


def init_params(key, mid_nc, kernel_size, num_multiple, num_blocks):
    """Deterministic synthetic weights (PyTorch-like uniform fan-in bound),
    in Conv2d OIHW layout."""
    fan_in = mid_nc * kernel_size * kernel_size
    bound = 1.0 / (fan_in ** 0.5)
    params = []
    for _ in range(num_blocks):
        block = []
        for _ in range(num_multiple):
            key, k_w, k_b = jax.random.split(key, 3)
            w = jax.random.uniform(
                k_w, (mid_nc, mid_nc, kernel_size, kernel_size),
                jnp.float32, -bound, bound)
            b = jax.random.uniform(k_b, (mid_nc,), jnp.float32, -bound, bound)
            block.append((w, b))
        params.append(block)
    return params


def ref_forward(x_nchw, truck_params):
    """Pure-JAX reference (mirrors the PyTorch forward exactly)."""
    def conv(x, w, b):
        y = lax.conv_general_dilated(x, w, (1, 1), 'SAME',
                                     dimension_numbers=('NCHW', 'OIHW', 'NCHW'))
        return y + b[None, :, None, None]

    out = x_nchw
    for block in truck_params:
        t = out
        for (w, b) in block[:-1]:
            t = jax.nn.relu(conv(t, w, b))
        w, b = block[-1]
        out = jax.nn.relu(out + conv(t, w, b))
    return out


if __name__ == "__main__":
    mid_nc, kernel_size, num_multiple, num_blocks = 8, 3, 2, 2
    N, H, W = 2, 16, 16

    key = jax.random.PRNGKey(0)
    key, k_x = jax.random.split(key)
    x = jax.random.normal(k_x, (N, mid_nc, H, W), jnp.float32)   # NCHW

    params = init_params(key, mid_nc, kernel_size, num_multiple, num_blocks)
    w_packed = prepack_params(params)            # one-time prepack, outside jit

    out = jax.block_until_ready(res_truck_forward(
        x, w_packed, num_blocks=num_blocks, layers_per_block=num_multiple))
    ref = jax.block_until_ready(ref_forward(x, params))

    assert out.shape == x.shape and out.dtype == x.dtype
    assert jnp.allclose(out, ref, atol=1e-4, rtol=1e-4), "mismatch vs reference"
    print("KERNEL_OK")
</pallas_src>

<mosaic_0001>
module attributes {stable_mosaic.version = 11 : i64} {
  func.func @_res_truck_kernel(%arg0: i32, %arg1: memref<1x8x512xf32, #tpu.memory_space<vmem>>, %arg2: memref<32x80xf32, #tpu.memory_space<vmem>>, %arg3: memref<1x8x512xf32, #tpu.memory_space<vmem>>, %arg4: memref<80x512xf32, #tpu.memory_space<vmem>>) attributes {dimension_semantics = [#tpu.dimension_semantics<parallel>], iteration_bounds = array<i64: 1>, scalar_prefetch = 0 : i64, scratch_operands = 1 : i64, tpu.core_type = #tpu.core_type<tc>, window_params = [{transform_indices = @transform_0, window_bounds = array<i64: 1, 8, 512>}, {pipeline_mode = #tpu.pipeline_mode<synchronous>, transform_indices = @transform_1, window_bounds = array<i64: 32, 80>}, {transform_indices = @transform_2, window_bounds = array<i64: 1, 8, 512>}]} {
    %c0 = arith.constant 0 : index
    %c0_0 = arith.constant 0 : index
    %c0_1 = arith.constant 0 : index
    %0 = vector.load %arg1[%c0, %c0_0, %c0_1] : memref<1x8x512xf32, #tpu.memory_space<vmem>>, vector<1x8x512xf32>
    %1 = vector.shape_cast %0 : vector<1x8x512xf32> to vector<8x512xf32>
    %2 = tpu.iota {dimensions = array<i32: 1>} : vector<8x512xi32>
    %c255_i32 = arith.constant 255 : i32
    %3 = vector.broadcast %c255_i32 : i32 to vector<8x512xi32>
    %4 = arith.andi %2, %3 : vector<8x512xi32>
    %c15_i32 = arith.constant 15 : i32
    %5 = vector.broadcast %c15_i32 : i32 to vector<8x512xi32>
    %6 = arith.andi %2, %5 : vector<8x512xi32>
    %c16_i32 = arith.constant 16 : i32
    %7 = vector.broadcast %c16_i32 : i32 to vector<8x512xi32>
    %8 = arith.cmpi sge, %4, %7 : vector<8x512xi32>
    %c240_i32 = arith.constant 240 : i32
    %9 = vector.broadcast %c240_i32 : i32 to vector<8x512xi32>
    %10 = arith.cmpi slt, %4, %9 : vector<8x512xi32>
    %c1_i32 = arith.constant 1 : i32
    %11 = vector.broadcast %c1_i32 : i32 to vector<8x512xi32>
    %12 = arith.cmpi sge, %6, %11 : vector<8x512xi32>
    %c15_i32_2 = arith.constant 15 : i32
    %13 = vector.broadcast %c15_i32_2 : i32 to vector<8x512xi32>
    %14 = arith.cmpi slt, %6, %13 : vector<8x512xi32>
    %15 = tpu.iota {dimensions = array<i32: 0>} : vector<8x512xi32>
    %c0_i32 = arith.constant 0 : i32
    %16 = vector.broadcast %c0_i32 : i32 to vector<8x512xi32>
    %17 = arith.cmpi eq, %15, %16 : vector<8x512xi32>
    %18 = arith.extui %17 : vector<8x512xi1> to vector<8x512xi32>
    %19 = arith.sitofp %18 : vector<8x512xi32> to vector<8x512xf32>
    %c72 = arith.constant 72 : index
    %c0_3 = arith.constant 0 : index
    %20 = vector.load %arg4[%c72, %c0_3] : memref<80x512xf32, #tpu.memory_space<vmem>>, vector<8x512xf32>
    tpu.vector_store %arg4[%c72, %c0_3], %19 {strides = array<i32>} : memref<80x512xf32, #tpu.memory_space<vmem>>, vector<8x512xf32>,
    %c16_i32_4 = arith.constant 16 : i32
    %21 = tpu.dynamic_rotate %1 by %c16_i32_4 dim 1 : vector<8x512xf32>, i32 -> vector<8x512xf32>
    %cst = arith.constant 0.000000e+00 : f32
    %22 = vector.broadcast %cst : f32 to vector<8x512xf32>
    %23 = arith.select %8, %21, %22 : vector<8x512xi1>, vector<8x512xf32>
    %c1_i32_5 = arith.constant 1 : i32
    %24 = tpu.dynamic_rotate %23 by %c1_i32_5 dim 1 : vector<8x512xf32>, i32 -> vector<8x512xf32>
    %cst_6 = arith.constant 0.000000e+00 : f32
    %25 = vector.broadcast %cst_6 : f32 to vector<8x512xf32>
    %26 = arith.select %12, %24, %25 : vector<8x512xi1>, vector<8x512xf32>
    %c0_7 = arith.constant 0 : index
    %c0_8 = arith.constant 0 : index
    %27 = vector.load %arg4[%c0_7, %c0_8] : memref<80x512xf32, #tpu.memory_space<vmem>>, vector<8x512xf32>
    tpu.vector_store %arg4[%c0_7, %c0_8], %26 {strides = array<i32>} : memref<80x512xf32, #tpu.memory_space<vmem>>, vector<8x512xf32>,
    %c8 = arith.constant 8 : index
    %c0_9 = arith.constant 0 : index
    %28 = vector.load %arg4[%c8, %c0_9] : memref<80x512xf32, #tpu.memory_space<vmem>>, vector<8x512xf32>
    tpu.vector_store %arg4[%c8, %c0_9], %23 {strides = array<i32>} : memref<80x512xf32, #tpu.memory_space<vmem>>, vector<8x512xf32>,
    %c511_i32 = arith.constant 511 : i32
    %29 = tpu.dynamic_rotate %23 by %c511_i32 dim 1 : vector<8x512xf32>, i32 -> vector<8x512xf32>
    %cst_10 = arith.constant 0.000000e+00 : f32
    %30 = vector.broadcast %cst_10 : f32 to vector<8x512xf32>
    %31 = arith.select %14, %29, %30 : vector<8x512xi1>, vector<8x512xf32>
    %c16 = arith.constant 16 : index
    %c0_11 = arith.constant 0 : index
    %32 = vector.load %arg4[%c16, %c0_11] : memref<80x512xf32, #tpu.memory_space<vmem>>, vector<8x512xf32>
    tpu.vector_store %arg4[%c16, %c0_11], %31 {strides = array<i32>} : memref<80x512xf32, #tpu.memory_space<vmem>>, vector<8x512xf32>,
    %c1_i32_12 = arith.constant 1 : i32
    %33 = tpu.dynamic_rotate %1 by %c1_i32_12 dim 1 : vector<8x512xf32>, i32 -> vector<8x512xf32>
    %cst_13 = arith.constant 0.000000e+00 : f32
    %34 = vector.broadcast %cst_13 : f32 to vector<8x512xf32>
    %35 = arith.select %12, %33, %34 : vector<8x512xi1>, vector<8x512xf32>
    %c24 = arith.constant 24 : index
    %c0_14 = arith.constant 0 : index
    %36 = vector.load %arg4[%c24, %c0_14] : memref<80x512xf32, #tpu.memory_space<vmem>>, vector<8x512xf32>
    tpu.vector_store %arg4[%c24, %c0_14], %35 {strides = array<i32>} : memref<80x512xf32, #tpu.memory_space<vmem>>, vector<8x512xf32>,
    %c32 = arith.constant 32 : index
    %c0_15 = arith.constant 0 : index
    %37 = vector.load %arg4[%c32, %c0_15] : memref<80x512xf32, #tpu.memory_space<vmem>>, vector<8x512xf32>
    tpu.vector_store %arg4[%c32, %c0_15], %1 {strides = array<i32>} : memref<80x512xf32, #tpu.memory_space<vmem>>, vector<8x512xf32>,
    %c511_i32_16 = arith.constant 511 : i32
    %38 = tpu.dynamic_rotate %1 by %c511_i32_16 dim 1 : vector<8x512xf32>, i32 -> vector<8x512xf32>
    %cst_17 = arith.constant 0.000000e+00 : f32
    %39 = vector.broadcast %cst_17 : f32 to vector<8x512xf32>
    %40 = arith.select %14, %38, %39 : vector<8x512xi1>, vector<8x512xf32>
    %c40 = arith.constant 40 : index
    %c0_18 = arith.constant 0 : index
    %41 = vector.load %arg4[%c40, %c0_18] : memref<80x512xf32, #tpu.memory_space<vmem>>, vector<8x512xf32>
    tpu.vector_store %arg4[%c40, %c0_18], %40 {strides = array<i32>} : memref<80x512xf32, #tpu.memory_space<vmem>>, vector<8x512xf32>,
    %c496_i32 = arith.constant 496 : i32
    %42 = tpu.dynamic_rotate %1 by %c496_i32 dim 1 : vector<8x512xf32>, i32 -> vector<8x512xf32>
    %cst_19 = arith.constant 0.000000e+00 : f32
    %43 = vector.broadcast %cst_19 : f32 to vector<8x512xf32>
    %44 = arith.select %10, %42, %43 : vector<8x512xi1>, vector<8x512xf32>
    %c1_i32_20 = arith.constant 1 : i32
    %45 = tpu.dynamic_rotate %44 by %c1_i32_20 dim 1 : vector<8x512xf32>, i32 -> vector<8x512xf32>
    %cst_21 = arith.constant 0.000000e+00 : f32
    %46 = vector.broadcast %cst_21 : f32 to vector<8x512xf32>
    %47 = arith.select %12, %45, %46 : vector<8x512xi1>, vector<8x512xf32>
    %c48 = arith.constant 48 : index
    %c0_22 = arith.constant 0 : index
    %48 = vector.load %arg4[%c48, %c0_22] : memref<80x512xf32, #tpu.memory_space<vmem>>, vector<8x512xf32>
    tpu.vector_store %arg4[%c48, %c0_22], %47 {strides = array<i32>} : memref<80x512xf32, #tpu.memory_space<vmem>>, vector<8x512xf32>,
    %c56 = arith.constant 56 : index
    %c0_23 = arith.constant 0 : index
    %49 = vector.load %arg4[%c56, %c0_23] : memref<80x512xf32, #tpu.memory_space<vmem>>, vector<8x512xf32>
    tpu.vector_store %arg4[%c56, %c0_23], %44 {strides = array<i32>} : memref<80x512xf32, #tpu.memory_space<vmem>>, vector<8x512xf32>,
    %c511_i32_24 = arith.constant 511 : i32
    %50 = tpu.dynamic_rotate %44 by %c511_i32_24 dim 1 : vector<8x512xf32>, i32 -> vector<8x512xf32>
    %cst_25 = arith.constant 0.000000e+00 : f32
    %51 = vector.broadcast %cst_25 : f32 to vector<8x512xf32>
    %52 = arith.select %14, %50, %51 : vector<8x512xi1>, vector<8x512xf32>
    %c64 = arith.constant 64 : index
    %c0_26 = arith.constant 0 : index
    %53 = vector.load %arg4[%c64, %c0_26] : memref<80x512xf32, #tpu.memory_space<vmem>>, vector<8x512xf32>
    tpu.vector_store %arg4[%c64, %c0_26], %52 {strides = array<i32>} : memref<80x512xf32, #tpu.memory_space<vmem>>, vector<8x512xf32>,
    %c0_27 = arith.constant 0 : index
    %c0_28 = arith.constant 0 : index
    %54 = vector.load %arg2[%c0_27, %c0_28] : memref<32x80xf32, #tpu.memory_space<vmem>>, vector<8x80xf32>
    %c0_29 = arith.constant 0 : index
    %c0_30 = arith.constant 0 : index
    %55 = vector.load %arg4[%c0_29, %c0_30] : memref<80x512xf32, #tpu.memory_space<vmem>>, vector<80x512xf32>
    %cst_31 = arith.constant dense<0.000000e+00> : vector<8x512xf32>
    %56 = tpu.matmul %54, %55, %cst_31 {dimension_numbers = #tpu.dot_dimension_numbers<[1], [0], [0], [1], [0, 0, 1, 1], [], []>} : vector<8x80xf32>, vector<80x512xf32>, vector<8x512xf32> -> vector<8x512xf32>
    %cst_32 = arith.constant 0.000000e+00 : f32
    %57 = vector.broadcast %cst_32 : f32 to vector<8x512xf32>
    %58 = arith.maximumf %56, %57 : vector<8x512xf32>
    %c16_i32_33 = arith.constant 16 : i32
    %59 = tpu.dynamic_rotate %58 by %c16_i32_33 dim 1 : vector<8x512xf32>, i32 -> vector<8x512xf32>
    %cst_34 = arith.constant 0.000000e+00 : f32
    %60 = vector.broadcast %cst_34 : f32 to vector<8x512xf32>
    %61 = arith.select %8, %59, %60 : vector<8x512xi1>, vector<8x512xf32>
    %c1_i32_35 = arith.constant 1 : i32
    %62 = tpu.dynamic_rotate %61 by %c1_i32_35 dim 1 : vector<8x512xf32>, i32 -> vector<8x512xf32>
    %cst_36 = arith.constant 0.000000e+00 : f32
    %63 = vector.broadcast %cst_36 : f32 to vector<8x512xf32>
    %64 = arith.select %12, %62, %63 : vector<8x512xi1>, vector<8x512xf32>
    %c0_37 = arith.constant 0 : index
    %c0_38 = arith.constant 0 : index
    %65 = vector.load %arg4[%c0_37, %c0_38] : memref<80x512xf32, #tpu.memory_space<vmem>>, vector<8x512xf32>
    tpu.vector_store %arg4[%c0_37, %c0_38], %64 {strides = array<i32>} : memref<80x512xf32, #tpu.memory_space<vmem>>, vector<8x512xf32>,
    %c8_39 = arith.constant 8 : index
    %c0_40 = arith.constant 0 : index
    %66 = vector.load %arg4[%c8_39, %c0_40] : memref<80x512xf32, #tpu.memory_space<vmem>>, vector<8x512xf32>
    tpu.vector_store %arg4[%c8_39, %c0_40], %61 {strides = array<i32>} : memref<80x512xf32, #tpu.memory_space<vmem>>, vector<8x512xf32>,
    %c511_i32_41 = arith.constant 511 : i32
    %67 = tpu.dynamic_rotate %61 by %c511_i32_41 dim 1 : vector<8x512xf32>, i32 -> vector<8x512xf32>
    %cst_42 = arith.constant 0.000000e+00 : f32
    %68 = vector.broadcast %cst_42 : f32 to vector<8x512xf32>
    %69 = arith.select %14, %67, %68 : vector<8x512xi1>, vector<8x512xf32>
    %c16_43 = arith.constant 16 : index
    %c0_44 = arith.constant 0 : index
    %70 = vector.load %arg4[%c16_43, %c0_44] : memref<80x512xf32, #tpu.memory_space<vmem>>, vector<8x512xf32>
    tpu.vector_store %arg4[%c16_43, %c0_44], %69 {strides = array<i32>} : memref<80x512xf32, #tpu.memory_space<vmem>>, vector<8x512xf32>,
    %c1_i32_45 = arith.constant 1 : i32
    %71 = tpu.dynamic_rotate %58 by %c1_i32_45 dim 1 : vector<8x512xf32>, i32 -> vector<8x512xf32>
    %cst_46 = arith.constant 0.000000e+00 : f32
    %72 = vector.broadcast %cst_46 : f32 to vector<8x512xf32>
    %73 = arith.select %12, %71, %72 : vector<8x512xi1>, vector<8x512xf32>
    %c24_47 = arith.constant 24 : index
    %c0_48 = arith.constant 0 : index
    %74 = vector.load %arg4[%c24_47, %c0_48] : memref<80x512xf32, #tpu.memory_space<vmem>>, vector<8x512xf32>
    tpu.vector_store %arg4[%c24_47, %c0_48], %73 {strides = array<i32>} : memref<80x512xf32, #tpu.memory_space<vmem>>, vector<8x512xf32>,
    %c32_49 = arith.constant 32 : index
    %c0_50 = arith.constant 0 : index
    %75 = vector.load %arg4[%c32_49, %c0_50] : memref<80x512xf32, #tpu.memory_space<vmem>>, vector<8x512xf32>
    tpu.vector_store %arg4[%c32_49, %c0_50], %58 {strides = array<i32>} : memref<80x512xf32, #tpu.memory_space<vmem>>, vector<8x512xf32>,
    %c511_i32_51 = arith.constant 511 : i32
    %76 = tpu.dynamic_rotate %58 by %c511_i32_51 dim 1 : vector<8x512xf32>, i32 -> vector<8x512xf32>
    %cst_52 = arith.constant 0.000000e+00 : f32
    %77 = vector.broadcast %cst_52 : f32 to vector<8x512xf32>
    %78 = arith.select %14, %76, %77 : vector<8x512xi1>, vector<8x512xf32>
    %c40_53 = arith.constant 40 : index
    %c0_54 = arith.constant 0 : index
    %79 = vector.load %arg4[%c40_53, %c0_54] : memref<80x512xf32, #tpu.memory_space<vmem>>, vector<8x512xf32>
    tpu.vector_store %arg4[%c40_53, %c0_54], %78 {strides = array<i32>} : memref<80x512xf32, #tpu.memory_space<vmem>>, vector<8x512xf32>,
    %c496_i32_55 = arith.constant 496 : i32
    %80 = tpu.dynamic_rotate %58 by %c496_i32_55 dim 1 : vector<8x512xf32>, i32 -> vector<8x512xf32>
    %cst_56 = arith.constant 0.000000e+00 : f32
    %81 = vector.broadcast %cst_56 : f32 to vector<8x512xf32>
    %82 = arith.select %10, %80, %81 : vector<8x512xi1>, vector<8x512xf32>
    %c1_i32_57 = arith.constant 1 : i32
    %83 = tpu.dynamic_rotate %82 by %c1_i32_57 dim 1 : vector<8x512xf32>, i32 -> vector<8x512xf32>
    %cst_58 = arith.constant 0.000000e+00 : f32
    %84 = vector.broadcast %cst_58 : f32 to vector<8x512xf32>
    %85 = arith.select %12, %83, %84 : vector<8x512xi1>, vector<8x512xf32>
    %c48_59 = arith.constant 48 : index
    %c0_60 = arith.constant 0 : index
    %86 = vector.load %arg4[%c48_59, %c0_60] : memref<80x512xf32, #tpu.memory_space<vmem>>, vector<8x512xf32>
    tpu.vector_store %arg4[%c48_59, %c0_60], %85 {strides = array<i32>} : memref<80x512xf32, #tpu.memory_space<vmem>>, vector<8x512xf32>,
    %c56_61 = arith.constant 56 : index
    %c0_62 = arith.constant 0 : index
    %87 = vector.load %arg4[%c56_61, %c0_62] : memref<80x512xf32, #tpu.memory_space<vmem>>, vector<8x512xf32>
    tpu.vector_store %arg4[%c56_61, %c0_62], %82 {strides = array<i32>} : memref<80x512xf32, #tpu.memory_space<vmem>>, vector<8x512xf32>,
    %c511_i32_63 = arith.constant 511 : i32
    %88 = tpu.dynamic_rotate %82 by %c511_i32_63 dim 1 : vector<8x512xf32>, i32 -> vector<8x512xf32>
    %cst_64 = arith.constant 0.000000e+00 : f32
    %89 = vector.broadcast %cst_64 : f32 to vector<8x512xf32>
    %90 = arith.select %14, %88, %89 : vector<8x512xi1>, vector<8x512xf32>
    %c64_65 = arith.constant 64 : index
    %c0_66 = arith.constant 0 : index
    %91 = vector.load %arg4[%c64_65, %c0_66] : memref<80x512xf32, #tpu.memory_space<vmem>>, vector<8x512xf32>
    tpu.vector_store %arg4[%c64_65, %c0_66], %90 {strides = array<i32>} : memref<80x512xf32, #tpu.memory_space<vmem>>, vector<8x512xf32>,
    %c8_67 = arith.constant 8 : index
    %c0_68 = arith.constant 0 : index
    %92 = vector.load %arg2[%c8_67, %c0_68] : memref<32x80xf32, #tpu.memory_space<vmem>>, vector<8x80xf32>
    %c0_69 = arith.constant 0 : index
    %c0_70 = arith.constant 0 : index
    %93 = vector.load %arg4[%c0_69, %c0_70] : memref<80x512xf32, #tpu.memory_space<vmem>>, vector<80x512xf32>
    %cst_71 = arith.constant dense<0.000000e+00> : vector<8x512xf32>
    %94 = tpu.matmul %92, %93, %cst_71 {dimension_numbers = #tpu.dot_dimension_numbers<[1], [0], [0], [1], [0, 0, 1, 1], [], []>} : vector<8x80xf32>, vector<80x512xf32>, vector<8x512xf32> -> vector<8x512xf32>
    %95 = arith.addf %1, %94 : vector<8x512xf32>
    %cst_72 = arith.constant 0.000000e+00 : f32
    %96 = vector.broadcast %cst_72 : f32 to vector<8x512xf32>
    %97 = arith.maximumf %95, %96 : vector<8x512xf32>
    %c16_i32_73 = arith.constant 16 : i32
    %98 = tpu.dynamic_rotate %97 by %c16_i32_73 dim 1 : vector<8x512xf32>, i32 -> vector<8x512xf32>
    %cst_74 = arith.constant 0.000000e+00 : f32
    %99 = vector.broadcast %cst_74 : f32 to vector<8x512xf32>
    %100 = arith.select %8, %98, %99 : vector<8x512xi1>, vector<8x512xf32>
    %c1_i32_75 = arith.constant 1 : i32
    %101 = tpu.dynamic_rotate %100 by %c1_i32_75 dim 1 : vector<8x512xf32>, i32 -> vector<8x512xf32>
    %cst_76 = arith.constant 0.000000e+00 : f32
    %102 = vector.broadcast %cst_76 : f32 to vector<8x512xf32>
    %103 = arith.select %12, %101, %102 : vector<8x512xi1>, vector<8x512xf32>
    %c0_77 = arith.constant 0 : index
    %c0_78 = arith.constant 0 : index
    %104 = vector.load %arg4[%c0_77, %c0_78] : memref<80x512xf32, #tpu.memory_space<vmem>>, vector<8x512xf32>
    tpu.vector_store %arg4[%c0_77, %c0_78], %103 {strides = array<i32>} : memref<80x512xf32, #tpu.memory_space<vmem>>, vector<8x512xf32>,
    %c8_79 = arith.constant 8 : index
    %c0_80 = arith.constant 0 : index
    %105 = vector.load %arg4[%c8_79, %c0_80] : memref<80x512xf32, #tpu.memory_space<vmem>>, vector<8x512xf32>
    tpu.vector_store %arg4[%c8_79, %c0_80], %100 {strides = array<i32>} : memref<80x512xf32, #tpu.memory_space<vmem>>, vector<8x512xf32>,
    %c511_i32_81 = arith.constant 511 : i32
    %106 = tpu.dynamic_rotate %100 by %c511_i32_81 dim 1 : vector<8x512xf32>, i32 -> vector<8x512xf32>
    %cst_82 = arith.constant 0.000000e+00 : f32
    %107 = vector.broadcast %cst_82 : f32 to vector<8x512xf32>
    %108 = arith.select %14, %106, %107 : vector<8x512xi1>, vector<8x512xf32>
    %c16_83 = arith.constant 16 : index
    %c0_84 = arith.constant 0 : index
    %109 = vector.load %arg4[%c16_83, %c0_84] : memref<80x512xf32, #tpu.memory_space<vmem>>, vector<8x512xf32>
    tpu.vector_store %arg4[%c16_83, %c0_84], %108 {strides = array<i32>} : memref<80x512xf32, #tpu.memory_space<vmem>>, vector<8x512xf32>,
    %c1_i32_85 = arith.constant 1 : i32
    %110 = tpu.dynamic_rotate %97 by %c1_i32_85 dim 1 : vector<8x512xf32>, i32 -> vector<8x512xf32>
    %cst_86 = arith.constant 0.000000e+00 : f32
    %111 = vector.broadcast %cst_86 : f32 to vector<8x512xf32>
    %112 = arith.select %12, %110, %111 : vector<8x512xi1>, vector<8x512xf32>
    %c24_87 = arith.constant 24 : index
    %c0_88 = arith.constant 0 : index
    %113 = vector.load %arg4[%c24_87, %c0_88] : memref<80x512xf32, #tpu.memory_space<vmem>>, vector<8x512xf32>
    tpu.vector_store %arg4[%c24_87, %c0_88], %112 {strides = array<i32>} : memref<80x512xf32, #tpu.memory_space<vmem>>, vector<8x512xf32>,
    %c32_89 = arith.constant 32 : index
    %c0_90 = arith.constant 0 : index
    %114 = vector.load %arg4[%c32_89, %c0_90] : memref<80x512xf32, #tpu.memory_space<vmem>>, vector<8x512xf32>
    tpu.vector_store %arg4[%c32_89, %c0_90], %97 {strides = array<i32>} : memref<80x512xf32, #tpu.memory_space<vmem>>, vector<8x512xf32>,
    %c511_i32_91 = arith.constant 511 : i32
    %115 = tpu.dynamic_rotate %97 by %c511_i32_91 dim 1 : vector<8x512xf32>, i32 -> vector<8x512xf32>
    %cst_92 = arith.constant 0.000000e+00 : f32
    %116 = vector.broadcast %cst_92 : f32 to vector<8x512xf32>
    %117 = arith.select %14, %115, %116 : vector<8x512xi1>, vector<8x512xf32>
    %c40_93 = arith.constant 40 : index
    %c0_94 = arith.constant 0 : index
    %118 = vector.load %arg4[%c40_93, %c0_94] : memref<80x512xf32, #tpu.memory_space<vmem>>, vector<8x512xf32>
    tpu.vector_store %arg4[%c40_93, %c0_94], %117 {strides = array<i32>} : memref<80x512xf32, #tpu.memory_space<vmem>>, vector<8x512xf32>,
    %c496_i32_95 = arith.constant 496 : i32
    %119 = tpu.dynamic_rotate %97 by %c496_i32_95 dim 1 : vector<8x512xf32>, i32 -> vector<8x512xf32>
    %cst_96 = arith.constant 0.000000e+00 : f32
    %120 = vector.broadcast %cst_96 : f32 to vector<8x512xf32>
    %121 = arith.select %10, %119, %120 : vector<8x512xi1>, vector<8x512xf32>
    %c1_i32_97 = arith.constant 1 : i32
    %122 = tpu.dynamic_rotate %121 by %c1_i32_97 dim 1 : vector<8x512xf32>, i32 -> vector<8x512xf32>
    %cst_98 = arith.constant 0.000000e+00 : f32
    %123 = vector.broadcast %cst_98 : f32 to vector<8x512xf32>
    %124 = arith.select %12, %122, %123 : vector<8x512xi1>, vector<8x512xf32>
    %c48_99 = arith.constant 48 : index
    %c0_100 = arith.constant 0 : index
    %125 = vector.load %arg4[%c48_99, %c0_100] : memref<80x512xf32, #tpu.memory_space<vmem>>, vector<8x512xf32>
    tpu.vector_store %arg4[%c48_99, %c0_100], %124 {strides = array<i32>} : memref<80x512xf32, #tpu.memory_space<vmem>>, vector<8x512xf32>,
    %c56_101 = arith.constant 56 : index
    %c0_102 = arith.constant 0 : index
    %126 = vector.load %arg4[%c56_101, %c0_102] : memref<80x512xf32, #tpu.memory_space<vmem>>, vector<8x512xf32>
    tpu.vector_store %arg4[%c56_101, %c0_102], %121 {strides = array<i32>} : memref<80x512xf32, #tpu.memory_space<vmem>>, vector<8x512xf32>,
    %c511_i32_103 = arith.constant 511 : i32
    %127 = tpu.dynamic_rotate %121 by %c511_i32_103 dim 1 : vector<8x512xf32>, i32 -> vector<8x512xf32>
    %cst_104 = arith.constant 0.000000e+00 : f32
    %128 = vector.broadcast %cst_104 : f32 to vector<8x512xf32>
    %129 = arith.select %14, %127, %128 : vector<8x512xi1>, vector<8x512xf32>
    %c64_105 = arith.constant 64 : index
    %c0_106 = arith.constant 0 : index
    %130 = vector.load %arg4[%c64_105, %c0_106] : memref<80x512xf32, #tpu.memory_space<vmem>>, vector<8x512xf32>
    tpu.vector_store %arg4[%c64_105, %c0_106], %129 {strides = array<i32>} : memref<80x512xf32, #tpu.memory_space<vmem>>, vector<8x512xf32>,
    %c16_107 = arith.constant 16 : index
    %c0_108 = arith.constant 0 : index
    %131 = vector.load %arg2[%c16_107, %c0_108] : memref<32x80xf32, #tpu.memory_space<vmem>>, vector<8x80xf32>
    %c0_109 = arith.constant 0 : index
    %c0_110 = arith.constant 0 : index
    %132 = vector.load %arg4[%c0_109, %c0_110] : memref<80x512xf32, #tpu.memory_space<vmem>>, vector<80x512xf32>
    %cst_111 = arith.constant dense<0.000000e+00> : vector<8x512xf32>
    %133 = tpu.matmul %131, %132, %cst_111 {dimension_numbers = #tpu.dot_dimension_numbers<[1], [0], [0], [1], [0, 0, 1, 1], [], []>} : vector<8x80xf32>, vector<80x512xf32>, vector<8x512xf32> -> vector<8x512xf32>
    %cst_112 = arith.constant 0.000000e+00 : f32
    %134 = vector.broadcast %cst_112 : f32 to vector<8x512xf32>
    %135 = arith.maximumf %133, %134 : vector<8x512xf32>
    %c16_i32_113 = arith.constant 16 : i32
    %136 = tpu.dynamic_rotate %135 by %c16_i32_113 dim 1 : vector<8x512xf32>, i32 -> vector<8x512xf32>
    %cst_114 = arith.constant 0.000000e+00 : f32
    %137 = vector.broadcast %cst_114 : f32 to vector<8x512xf32>
    %138 = arith.select %8, %136, %137 : vector<8x512xi1>, vector<8x512xf32>
    %c1_i32_115 = arith.constant 1 : i32
    %139 = tpu.dynamic_rotate %138 by %c1_i32_115 dim 1 : vector<8x512xf32>, i32 -> vector<8x512xf32>
    %cst_116 = arith.constant 0.000000e+00 : f32
    %140 = vector.broadcast %cst_116 : f32 to vector<8x512xf32>
    %141 = arith.select %12, %139, %140 : vector<8x512xi1>, vector<8x512xf32>
    %c0_117 = arith.constant 0 : index
    %c0_118 = arith.constant 0 : index
    %142 = vector.load %arg4[%c0_117, %c0_118] : memref<80x512xf32, #tpu.memory_space<vmem>>, vector<8x512xf32>
    tpu.vector_store %arg4[%c0_117, %c0_118], %141 {strides = array<i32>} : memref<80x512xf32, #tpu.memory_space<vmem>>, vector<8x512xf32>,
    %c8_119 = arith.constant 8 : index
    %c0_120 = arith.constant 0 : index
    %143 = vector.load %arg4[%c8_119, %c0_120] : memref<80x512xf32, #tpu.memory_space<vmem>>, vector<8x512xf32>
    tpu.vector_store %arg4[%c8_119, %c0_120], %138 {strides = array<i32>} : memref<80x512xf32, #tpu.memory_space<vmem>>, vector<8x512xf32>,
    %c511_i32_121 = arith.constant 511 : i32
    %144 = tpu.dynamic_rotate %138 by %c511_i32_121 dim 1 : vector<8x512xf32>, i32 -> vector<8x512xf32>
    %cst_122 = arith.constant 0.000000e+00 : f32
    %145 = vector.broadcast %cst_122 : f32 to vector<8x512xf32>
    %146 = arith.select %14, %144, %145 : vector<8x512xi1>, vector<8x512xf32>
    %c16_123 = arith.constant 16 : index
    %c0_124 = arith.constant 0 : index
    %147 = vector.load %arg4[%c16_123, %c0_124] : memref<80x512xf32, #tpu.memory_space<vmem>>, vector<8x512xf32>
    tpu.vector_store %arg4[%c16_123, %c0_124], %146 {strides = array<i32>} : memref<80x512xf32, #tpu.memory_space<vmem>>, vector<8x512xf32>,
    %c1_i32_125 = arith.constant 1 : i32
    %148 = tpu.dynamic_rotate %135 by %c1_i32_125 dim 1 : vector<8x512xf32>, i32 -> vector<8x512xf32>
    %cst_126 = arith.constant 0.000000e+00 : f32
    %149 = vector.broadcast %cst_126 : f32 to vector<8x512xf32>
    %150 = arith.select %12, %148, %149 : vector<8x512xi1>, vector<8x512xf32>
    %c24_127 = arith.constant 24 : index
    %c0_128 = arith.constant 0 : index
    %151 = vector.load %arg4[%c24_127, %c0_128] : memref<80x512xf32, #tpu.memory_space<vmem>>, vector<8x512xf32>
    tpu.vector_store %arg4[%c24_127, %c0_128], %150 {strides = array<i32>} : memref<80x512xf32, #tpu.memory_space<vmem>>, vector<8x512xf32>,
    %c32_129 = arith.constant 32 : index
    %c0_130 = arith.constant 0 : index
    %152 = vector.load %arg4[%c32_129, %c0_130] : memref<80x512xf32, #tpu.memory_space<vmem>>, vector<8x512xf32>
    tpu.vector_store %arg4[%c32_129, %c0_130], %135 {strides = array<i32>} : memref<80x512xf32, #tpu.memory_space<vmem>>, vector<8x512xf32>,
    %c511_i32_131 = arith.constant 511 : i32
    %153 = tpu.dynamic_rotate %135 by %c511_i32_131 dim 1 : vector<8x512xf32>, i32 -> vector<8x512xf32>
    %cst_132 = arith.constant 0.000000e+00 : f32
    %154 = vector.broadcast %cst_132 : f32 to vector<8x512xf32>
    %155 = arith.select %14, %153, %154 : vector<8x512xi1>, vector<8x512xf32>
    %c40_133 = arith.constant 40 : index
    %c0_134 = arith.constant 0 : index
    %156 = vector.load %arg4[%c40_133, %c0_134] : memref<80x512xf32, #tpu.memory_space<vmem>>, vector<8x512xf32>
    tpu.vector_store %arg4[%c40_133, %c0_134], %155 {strides = array<i32>} : memref<80x512xf32, #tpu.memory_space<vmem>>, vector<8x512xf32>,
    %c496_i32_135 = arith.constant 496 : i32
    %157 = tpu.dynamic_rotate %135 by %c496_i32_135 dim 1 : vector<8x512xf32>, i32 -> vector<8x512xf32>
    %cst_136 = arith.constant 0.000000e+00 : f32
    %158 = vector.broadcast %cst_136 : f32 to vector<8x512xf32>
    %159 = arith.select %10, %157, %158 : vector<8x512xi1>, vector<8x512xf32>
    %c1_i32_137 = arith.constant 1 : i32
    %160 = tpu.dynamic_rotate %159 by %c1_i32_137 dim 1 : vector<8x512xf32>, i32 -> vector<8x512xf32>
    %cst_138 = arith.constant 0.000000e+00 : f32
    %161 = vector.broadcast %cst_138 : f32 to vector<8x512xf32>
    %162 = arith.select %12, %160, %161 : vector<8x512xi1>, vector<8x512xf32>
    %c48_139 = arith.constant 48 : index
    %c0_140 = arith.constant 0 : index
    %163 = vector.load %arg4[%c48_139, %c0_140] : memref<80x512xf32, #tpu.memory_space<vmem>>, vector<8x512xf32>
    tpu.vector_store %arg4[%c48_139, %c0_140], %162 {strides = array<i32>} : memref<80x512xf32, #tpu.memory_space<vmem>>, vector<8x512xf32>,
    %c56_141 = arith.constant 56 : index
    %c0_142 = arith.constant 0 : index
    %164 = vector.load %arg4[%c56_141, %c0_142] : memref<80x512xf32, #tpu.memory_space<vmem>>, vector<8x512xf32>
    tpu.vector_store %arg4[%c56_141, %c0_142], %159 {strides = array<i32>} : memref<80x512xf32, #tpu.memory_space<vmem>>, vector<8x512xf32>,
    %c511_i32_143 = arith.constant 511 : i32
    %165 = tpu.dynamic_rotate %159 by %c511_i32_143 dim 1 : vector<8x512xf32>, i32 -> vector<8x512xf32>
    %cst_144 = arith.constant 0.000000e+00 : f32
    %166 = vector.broadcast %cst_144 : f32 to vector<8x512xf32>
    %167 = arith.select %14, %165, %166 : vector<8x512xi1>, vector<8x512xf32>
    %c64_145 = arith.constant 64 : index
    %c0_146 = arith.constant 0 : index
    %168 = vector.load %arg4[%c64_145, %c0_146] : memref<80x512xf32, #tpu.memory_space<vmem>>, vector<8x512xf32>
    tpu.vector_store %arg4[%c64_145, %c0_146], %167 {strides = array<i32>} : memref<80x512xf32, #tpu.memory_space<vmem>>, vector<8x512xf32>,
    %c24_147 = arith.constant 24 : index
    %c0_148 = arith.constant 0 : index
    %169 = vector.load %arg2[%c24_147, %c0_148] : memref<32x80xf32, #tpu.memory_space<vmem>>, vector<8x80xf32>
    %c0_149 = arith.constant 0 : index
    %c0_150 = arith.constant 0 : index
    %170 = vector.load %arg4[%c0_149, %c0_150] : memref<80x512xf32, #tpu.memory_space<vmem>>, vector<80x512xf32>
    %cst_151 = arith.constant dense<0.000000e+00> : vector<8x512xf32>
    %171 = tpu.matmul %169, %170, %cst_151 {dimension_numbers = #tpu.dot_dimension_numbers<[1], [0], [0], [1], [0, 0, 1, 1], [], []>} : vector<8x80xf32>, vector<80x512xf32>, vector<8x512xf32> -> vector<8x512xf32>
    %172 = arith.addf %97, %171 : vector<8x512xf32>
    %cst_152 = arith.constant 0.000000e+00 : f32
    %173 = vector.broadcast %cst_152 : f32 to vector<8x512xf32>
    %174 = arith.maximumf %172, %173 : vector<8x512xf32>
    %c0_153 = arith.constant 0 : index
    %c0_154 = arith.constant 0 : index
    %c0_155 = arith.constant 0 : index
    %175 = vector.load %arg3[%c0_153, %c0_154, %c0_155] : memref<1x8x512xf32, #tpu.memory_space<vmem>>, vector<1x8x512xf32>
    %176 = vector.shape_cast %175 : vector<1x8x512xf32> to vector<8x512xf32>
    %177 = vector.shape_cast %174 : vector<8x512xf32> to vector<1x8x512xf32>
    tpu.vector_store %arg3[%c0_153, %c0_154, %c0_155], %177 {strides = array<i32>} : memref<1x8x512xf32, #tpu.memory_space<vmem>>, vector<1x8x512xf32>,
    return
  }
  func.func @transform_0(%arg0: i32) -> (i32, i32, i32) {
    %c0_i32 = arith.constant 0 : i32
    %c0_i32_0 = arith.constant 0 : i32
    %c0_i32_1 = arith.constant 0 : i32
    return %arg0, %c0_i32, %c0_i32_0 : i32, i32, i32
  }
  func.func @transform_1(%arg0: i32) -> (i32, i32) {
    %c0_i32 = arith.constant 0 : i32
    %c0_i32_0 = arith.constant 0 : i32
    %c0_i32_1 = arith.constant 0 : i32
    return %c0_i32, %c0_i32_0 : i32, i32
  }
  func.func @transform_2(%arg0: i32) -> (i32, i32, i32) {
    %c0_i32 = arith.constant 0 : i32
    %c0_i32_0 = arith.constant 0 : i32
    %c0_i32_1 = arith.constant 0 : i32
    return %arg0, %c0_i32, %c0_i32_0 : i32, i32, i32
  }
}

</mosaic_0001>

<llo_original>
// kernel: res_truck_forward.1
$region0: #{res_truck_forward.1}
  #allocation0 [shape = 'u32[]', space=smem, size = 0x4, offset = 0x4, fixed_abs, tag = 'smem constant byte address 0x4 - core index']
  #allocation1 [shape = 'u32[144,128]{1,0:T(1,128)}', space=vmem, size = 0x12000, scoped, tag = 'internal scratch']
  #allocation2 [shape = 'f32[80,512]{1,0:T(8,128)}', space=vmem, size = 0x28000, scoped, tag = 'scratch operand']
  %s0 = inlined_call_operand.vmem [shape: f32[1,8,512], index: 0, kind: input, shape index: {}]
  %s1 = inlined_call_operand.vmem [shape: f32[32,80], index: 1, kind: input, shape index: {}]
  %s2 = inlined_call_operand.vmem [shape: f32[1,8,512], index: 2, kind: output, shape index: {}]
  %s3 = sld [smem:[#allocation0]]
  $region18: #{res_truck_forward.1} parent=0
    _
  %s5 = ssub.s32 1, %s3
  %s6 = scalar_select 0, %s5, %s3
  // Predicated region
  $region2: #{res_truck_forward.1} parent=0 // pred_check
    _
  $region3: #{res_truck_forward.1} parent=0 // pred_check_branch
    %8 = sbr.rel (0) target = $region5
  $region4: #{res_truck_forward.1} parent=0 // pred_region
    _
  $region5: #{res_truck_forward.1} parent=0 // pred_fallthru
    _
  // Predicated region
  $region6: #{res_truck_forward.1} parent=0 // pred_check
    _
  $region7: #{res_truck_forward.1} parent=0 // pred_check_branch
    %10 = sbr.rel (0) target = $region9
  $region8: #{res_truck_forward.1} parent=0 // pred_region
    _
  $region9: #{res_truck_forward.1} parent=0 // pred_fallthru
    _
  %v11 = vld [vmem:[%s0] sm:$0xff]
  %v12 = vld [vmem:[%s0 + $0x8] sm:$0xff]
  %v13 = vld [vmem:[%s0 + $0x10] sm:$0xff]
  %v14 = vld [vmem:[%s0 + $0x18] sm:$0xff]
  %v15 = vlaneseq
  %v16 = vand.u32 %v15, 127
  %v17 = vadd.s32 %v16, 128
  %v18 = vadd.s32 %v16, 256
  %v19 = vadd.s32 %v16, 384
  %v20 = vand.u32 %v16, 255
  %v21 = vand.u32 %v17, 255
  %v22 = vand.u32 %v18, 255
  %v23 = vand.u32 %v19, 255
  %v24 = vand.u32 %v16, 15
  %v25 = vand.u32 %v17, 15
  %v26 = vand.u32 %v18, 15
  %v27 = vand.u32 %v19, 15
  %vm28 = vcmp.ge.s32.totalorder %v20, 16
  %vm29 = vcmp.ge.s32.totalorder %v21, 16
  %vm30 = vcmp.ge.s32.totalorder %v22, 16
  %vm31 = vcmp.ge.s32.totalorder %v23, 16
  %vm32 = vcmp.lt.s32.totalorder %v20, 240
  %vm33 = vcmp.lt.s32.totalorder %v21, 240
  %vm34 = vcmp.lt.s32.totalorder %v22, 240
  %vm35 = vcmp.lt.s32.totalorder %v23, 240
  %vm36 = vcmp.ge.s32.totalorder %v24, 1
  %vm37 = vcmp.ge.s32.totalorder %v25, 1
  %vm38 = vcmp.ge.s32.totalorder %v26, 1
  %vm39 = vcmp.ge.s32.totalorder %v27, 1
  %vm40 = vcmp.lt.s32.totalorder %v24, 15
  %vm41 = vcmp.lt.s32.totalorder %v25, 15
  %vm42 = vcmp.lt.s32.totalorder %v26, 15
  %vm43 = vcmp.lt.s32.totalorder %v27, 15
  %v44 = vlaneseq
  %v45 = vshrl.u32 %v44, 7
  %vm46 = vcmp.eq.s32.totalorder %v45, 0
  %v47 = vsel %vm46, 1, 0
  %v48 = vcvt.s32.f32 %v47
  %49 = vst [vmem:[#allocation2 + $0x120] sm:$0xff] %v48
  %50 = vst [vmem:[#allocation2 + $0x128] sm:$0xff] %v48
  %51 = vst [vmem:[#allocation2 + $0x130] sm:$0xff] %v48
  %52 = vst [vmem:[#allocation2 + $0x138] sm:$0xff] %v48
  %53 = vrot.lane.b32.xlu0 %v11, 16
  %v54 = vpop.permute.xlu0 %53
  %55 = vrot.lane.b32.xlu0 %v12, 16
  %v56 = vpop.permute.xlu0 %55
  %57 = vrot.lane.b32.xlu0 %v13, 16
  %v58 = vpop.permute.xlu0 %57
  %59 = vrot.lane.b32.xlu0 %v14, 16
  %v60 = vpop.permute.xlu0 %59
  %vm61 = vcmp.lt.s32.totalorder %v16, 16
  %v62 = vsel %vm61, %v58, %v60
  %v63 = vsel %vm61, %v56, %v58
  %v64 = vsel %vm61, %v54, %v56
  %v65 = vsel %vm61, %v60, %v54
  %v66 = vsel %vm28, %v65, 0.0
  %v67 = vsel %vm29, %v64, 0.0
  %v68 = vsel %vm30, %v63, 0.0
  %v69 = vsel %vm31, %v62, 0.0
  %70 = vrot.lane.b32.xlu0 %v66, 1
  %v71 = vpop.permute.xlu0 %70
  %72 = vrot.lane.b32.xlu0 %v67, 1
  %v73 = vpop.permute.xlu0 %72
  %74 = vrot.lane.b32.xlu0 %v68, 1
  %v75 = vpop.permute.xlu0 %74
  %76 = vrot.lane.b32.xlu0 %v69, 1
  %v77 = vpop.permute.xlu0 %76
  %vm78 = vcmp.lt.s32.totalorder %v16, 1
  %v79 = vsel %vm78, %v75, %v77
  %v80 = vsel %vm78, %v73, %v75
  %v81 = vsel %vm78, %v71, %v73
  %v82 = vsel %vm78, %v77, %v71
  %v83 = vsel %vm36, %v82, 0.0
  %v84 = vsel %vm37, %v81, 0.0
  %v85 = vsel %vm38, %v80, 0.0
  %v86 = vsel %vm39, %v79, 0.0
  %87 = vst [vmem:[#allocation2] sm:$0xff] %v83
  %88 = vst [vmem:[#allocation2 + $0x8] sm:$0xff] %v84
  %89 = vst [vmem:[#allocation2 + $0x10] sm:$0xff] %v85
  %90 = vst [vmem:[#allocation2 + $0x18] sm:$0xff] %v86
  %91 = vst [vmem:[#allocation2 + $0x20] sm:$0xff] %v66
  %92 = vst [vmem:[#allocation2 + $0x28] sm:$0xff] %v67
  %93 = vst [vmem:[#allocation2 + $0x30] sm:$0xff] %v68
  %94 = vst [vmem:[#allocation2 + $0x38] sm:$0xff] %v69
  %95 = vrot.lane.b32.xlu0 %v66, 127
  %v96 = vpop.permute.xlu0 %95
  %97 = vrot.lane.b32.xlu0 %v67, 127
  %v98 = vpop.permute.xlu0 %97
  %99 = vrot.lane.b32.xlu0 %v68, 127
  %v100 = vpop.permute.xlu0 %99
  %101 = vrot.lane.b32.xlu0 %v69, 127
  %v102 = vpop.permute.xlu0 %101
  %vm103 = vcmp.lt.s32.totalorder %v16, 127
  %v104 = vsel %vm103, %v100, %v102
  %v105 = vsel %vm103, %v98, %v100
  %v106 = vsel %vm103, %v96, %v98
  %v107 = vsel %vm103, %v102, %v96
  %v108 = vsel %vm40, %v106, 0.0
  %v109 = vsel %vm41, %v105, 0.0
  %v110 = vsel %vm42, %v104, 0.0
  %v111 = vsel %vm43, %v107, 0.0
  %112 = vst [vmem:[#allocation2 + $0x40] sm:$0xff] %v108
  %113 = vst [vmem:[#allocation2 + $0x48] sm:$0xff] %v109
  %114 = vst [vmem:[#allocation2 + $0x50] sm:$0xff] %v110
  %115 = vst [vmem:[#allocation2 + $0x58] sm:$0xff] %v111
  %116 = vrot.lane.b32.xlu0 %v11, 1
  %v117 = vpop.permute.xlu0 %116
  %118 = vrot.lane.b32.xlu0 %v12, 1
  %v119 = vpop.permute.xlu0 %118
  %120 = vrot.lane.b32.xlu0 %v13, 1
  %v121 = vpop.permute.xlu0 %120
  %122 = vrot.lane.b32.xlu0 %v14, 1
  %v123 = vpop.permute.xlu0 %122
  %v124 = vsel %vm78, %v121, %v123
  %v125 = vsel %vm78, %v119, %v121
  %v126 = vsel %vm78, %v117, %v119
  %v127 = vsel %vm78, %v123, %v117
  %v128 = vsel %vm36, %v127, 0.0
  %v129 = vsel %vm37, %v126, 0.0
  %v130 = vsel %vm38, %v125, 0.0
  %v131 = vsel %vm39, %v124, 0.0
  %132 = vst [vmem:[#allocation2 + $0x60] sm:$0xff] %v128
  %133 = vst [vmem:[#allocation2 + $0x68] sm:$0xff] %v129
  %134 = vst [vmem:[#allocation2 + $0x70] sm:$0xff] %v130
  %135 = vst [vmem:[#allocation2 + $0x78] sm:$0xff] %v131
  %136 = vst [vmem:[#allocation2 + $0x80] sm:$0xff] %v11
  %137 = vst [vmem:[#allocation2 + $0x88] sm:$0xff] %v12
  %138 = vst [vmem:[#allocation2 + $0x90] sm:$0xff] %v13
  %139 = vst [vmem:[#allocation2 + $0x98] sm:$0xff] %v14
  %140 = vrot.lane.b32.xlu0 %v11, 127
  %v141 = vpop.permute.xlu0 %140
  %142 = vrot.lane.b32.xlu0 %v12, 127
  %v143 = vpop.permute.xlu0 %142
  %144 = vrot.lane.b32.xlu0 %v13, 127
  %v145 = vpop.permute.xlu0 %144
  %146 = vrot.lane.b32.xlu0 %v14, 127
  %v147 = vpop.permute.xlu0 %146
  %v148 = vsel %vm103, %v145, %v147
  %v149 = vsel %vm103, %v143, %v145
  %v150 = vsel %vm103, %v141, %v143
  %v151 = vsel %vm103, %v147, %v141
  %v152 = vsel %vm40, %v150, 0.0
  %v153 = vsel %vm41, %v149, 0.0
  %v154 = vsel %vm42, %v148, 0.0
  %v155 = vsel %vm43, %v151, 0.0
  %156 = vst [vmem:[#allocation2 + $0xa0] sm:$0xff] %v152
  %157 = vst [vmem:[#allocation2 + $0xa8] sm:$0xff] %v153
  %158 = vst [vmem:[#allocation2 + $0xb0] sm:$0xff] %v154
  %159 = vst [vmem:[#allocation2 + $0xb8] sm:$0xff] %v155
  %160 = vrot.lane.b32.xlu0 %v11, 112
  %v161 = vpop.permute.xlu0 %160
  %162 = vrot.lane.b32.xlu0 %v12, 112
  %v163 = vpop.permute.xlu0 %162
  %164 = vrot.lane.b32.xlu0 %v13, 112
  %v165 = vpop.permute.xlu0 %164
  %166 = vrot.lane.b32.xlu0 %v14, 112
  %v167 = vpop.permute.xlu0 %166
  %vm168 = vcmp.lt.s32.totalorder %v16, 112
  %v169 = vsel %vm168, %v165, %v167
  %v170 = vsel %vm168, %v163, %v165
  %v171 = vsel %vm168, %v161, %v163
  %v172 = vsel %vm168, %v167, %v161
  %v173 = vsel %vm32, %v171, 0.0
  %v174 = vsel %vm33, %v170, 0.0
  %v175 = vsel %vm34, %v169, 0.0
  %v176 = vsel %vm35, %v172, 0.0
  %177 = vrot.lane.b32.xlu0 %v173, 1
  %v178 = vpop.permute.xlu0 %177
  %179 = vrot.lane.b32.xlu0 %v174, 1
  %v180 = vpop.permute.xlu0 %179
  %181 = vrot.lane.b32.xlu0 %v175, 1
  %v182 = vpop.permute.xlu0 %181
  %183 = vrot.lane.b32.xlu0 %v176, 1
  %v184 = vpop.permute.xlu0 %183
  %v185 = vsel %vm78, %v182, %v184
  %v186 = vsel %vm78, %v180, %v182
  %v187 = vsel %vm78, %v178, %v180
  %v188 = vsel %vm78, %v184, %v178
  %v189 = vsel %vm36, %v188, 0.0
  %v190 = vsel %vm37, %v187, 0.0
  %v191 = vsel %vm38, %v186, 0.0
  %v192 = vsel %vm39, %v185, 0.0
  %193 = vst [vmem:[#allocation2 + $0xc0] sm:$0xff] %v189
  %194 = vst [vmem:[#allocation2 + $0xc8] sm:$0xff] %v190
  %195 = vst [vmem:[#allocation2 + $0xd0] sm:$0xff] %v191
  %196 = vst [vmem:[#allocation2 + $0xd8] sm:$0xff] %v192
  %197 = vst [vmem:[#allocation2 + $0xe0] sm:$0xff] %v173
  %198 = vst [vmem:[#allocation2 + $0xe8] sm:$0xff] %v174
  %199 = vst [vmem:[#allocation2 + $0xf0] sm:$0xff] %v175
  %200 = vst [vmem:[#allocation2 + $0xf8] sm:$0xff] %v176
  %201 = vrot.lane.b32.xlu0 %v173, 127
  %v202 = vpop.permute.xlu0 %201
  %203 = vrot.lane.b32.xlu0 %v174, 127
  %v204 = vpop.permute.xlu0 %203
  %205 = vrot.lane.b32.xlu0 %v175, 127
  %v206 = vpop.permute.xlu0 %205
  %207 = vrot.lane.b32.xlu0 %v176, 127
  %v208 = vpop.permute.xlu0 %207
  %v209 = vsel %vm103, %v206, %v208
  %v210 = vsel %vm103, %v204, %v206
  %v211 = vsel %vm103, %v202, %v204
  %v212 = vsel %vm103, %v208, %v202
  %v213 = vsel %vm40, %v211, 0.0
  %v214 = vsel %vm41, %v210, 0.0
  %v215 = vsel %vm42, %v209, 0.0
  %v216 = vsel %vm43, %v212, 0.0
  %217 = vst [vmem:[#allocation2 + $0x100] sm:$0xff] %v213
  %218 = vst [vmem:[#allocation2 + $0x108] sm:$0xff] %v214
  %219 = vst [vmem:[#allocation2 + $0x110] sm:$0xff] %v215
  %220 = vst [vmem:[#allocation2 + $0x118] sm:$0xff] %v216
  %v221 = vld [vmem:[%s1] sm:$0xff]
  %v222 = vld [vmem:[#allocation2] sm:$0xff]
  %v223 = vld [vmem:[#allocation2 + $0x8] sm:$0xff]
  %v224 = vld [vmem:[#allocation2 + $0x10] sm:$0xff]
  %v225 = vld [vmem:[#allocation2 + $0x18] sm:$0xff]
  %v226 = vld [vmem:[#allocation2 + $0x20] sm:$0xff]
  %v227 = vld [vmem:[#allocation2 + $0x28] sm:$0xff]
  %v228 = vld [vmem:[#allocation2 + $0x30] sm:$0xff]
  %v229 = vld [vmem:[#allocation2 + $0x38] sm:$0xff]
  %v230 = vld [vmem:[#allocation2 + $0x40] sm:$0xff]
  %v231 = vld [vmem:[#allocation2 + $0x48] sm:$0xff]
  %v232 = vld [vmem:[#allocation2 + $0x50] sm:$0xff]
  %v233 = vld [vmem:[#allocation2 + $0x58] sm:$0xff]
  %v234 = vld [vmem:[#allocation2 + $0x60] sm:$0xff]
  %v235 = vld [vmem:[#allocation2 + $0x68] sm:$0xff]
  %v236 = vld [vmem:[#allocation2 + $0x70] sm:$0xff]
  %v237 = vld [vmem:[#allocation2 + $0x78] sm:$0xff]
  %v238 = vld [vmem:[#allocation2 + $0x80] sm:$0xff]
  %v239 = vld [vmem:[#allocation2 + $0x88] sm:$0xff]
  %v240 = vld [vmem:[#allocation2 + $0x90] sm:$0xff]
  %v241 = vld [vmem:[#allocation2 + $0x98] sm:$0xff]
  %v242 = vld [vmem:[#allocation2 + $0xa0] sm:$0xff]
  %v243 = vld [vmem:[#allocation2 + $0xa8] sm:$0xff]
  %v244 = vld [vmem:[#allocation2 + $0xb0] sm:$0xff]
  %v245 = vld [vmem:[#allocation2 + $0xb8] sm:$0xff]
  %v246 = vld [vmem:[#allocation2 + $0xc0] sm:$0xff]
  %v247 = vld [vmem:[#allocation2 + $0xc8] sm:$0xff]
  %v248 = vld [vmem:[#allocation2 + $0xd0] sm:$0xff]
  %v249 = vld [vmem:[#allocation2 + $0xd8] sm:$0xff]
  %v250 = vld [vmem:[#allocation2 + $0xe0] sm:$0xff]
  %v251 = vld [vmem:[#allocation2 + $0xe8] sm:$0xff]
  %v252 = vld [vmem:[#allocation2 + $0xf0] sm:$0xff]
  %v253 = vld [vmem:[#allocation2 + $0xf8] sm:$0xff]
  %v254 = vld [vmem:[#allocation2 + $0x100] sm:$0xff]
  %v255 = vld [vmem:[#allocation2 + $0x108] sm:$0xff]
  %v256 = vld [vmem:[#allocation2 + $0x110] sm:$0xff]
  %v257 = vld [vmem:[#allocation2 + $0x118] sm:$0xff]
  %v258 = vld [vmem:[#allocation2 + $0x120] sm:$0xff]
  %v259 = vld [vmem:[#allocation2 + $0x128] sm:$0xff]
  %v260 = vld [vmem:[#allocation2 + $0x130] sm:$0xff]
  %v261 = vld [vmem:[#allocation2 + $0x138] sm:$0xff]
  %vm262 = vcmask 654336
  %v264 = vsel %vm262, %v221, 0
  %266 = vmatprep.subr.mxu0 %v223
  %267 = vmatpush1.msra.mxu0 %v222
  %268 = vmatprep.subr.mxu0 %v227
  %269 = vmatpush1.msra.mxu0 %v226
  %270 = vmatprep.subr.mxu0 %v231
  %271 = vmatpush1.msra.mxu0 %v230
  %272 = vmatprep.subr.mxu0 %v235
  %273 = vmatpush1.msra.mxu0 %v234
  %274 = vmatprep.subr.mxu0 %v239
  %275 = vmatpush1.msra.mxu0 %v238
  %276 = vmatprep.subr.mxu0 %v243
  %277 = vmatpush1.msra.mxu0 %v242
  %278 = vmatprep.subr.mxu0 %v247
  %279 = vmatpush1.msra.mxu0 %v246
  %280 = vmatprep.subr.mxu0 %v251
  %281 = vmatpush1.msra.mxu0 %v250
  %282 = vmatprep.subr.mxu0 %v255
  %283 = vmatpush1.msra.mxu0 %v254
  %284 = vmatprep.subr.mxu0 %v259
  %285 = vmatpush1.msra.mxu0 %v258
  %286 = vmatprep.subr.mxu0 0.0
  %287 = vmatpush1.msra.mxu0 0.0
  %288 = vmatprep.subr.mxu0 0.0
  %289 = vmatpush1.msra.mxu0 0.0
  %290 = vmatprep.subr.mxu0 0.0
  %291 = vmatpush1.msra.mxu0 0.0
  %292 = vmatprep.subr.mxu0 0.0
  %293 = vmatpush1.msra.mxu0 0.0
  %294 = vmatprep.subr.mxu0 0.0
  %295 = vmatpush1.msra.mxu0 0.0
  %296 = vmatprep.subr.mxu0 0.0
  %297 = vmatpush1.msra.mxu0 0.0
  %298 = vmatprep.subr.mxu0 0.0
  %299 = vmatpush1.msra.mxu0 0.0
  %300 = vmatprep.subr.mxu0 0.0
  %301 = vmatpush1.msra.mxu0 0.0
  %302 = vmatprep.subr.mxu0 0.0
  %303 = vmatpush1.msra.mxu0 0.0
  %304 = vmatprep.subr.mxu0 0.0
  %305 = vmatpush1.msra.mxu0 0.0
  %306 = vmatprep.subr.mxu0 0.0
  %307 = vmatpush1.msra.mxu0 0.0
  %308 = vmatprep.subr.mxu0 0.0
  %309 = vmatpush1.msra.mxu0 0.0
  %310 = vmatprep.subr.mxu0 0.0
  %311 = vmatpush1.msra.mxu0 0.0
  %312 = vmatprep.subr.mxu0 0.0
  %313 = vmatpush1.msra.mxu0 0.0
  %314 = vmatprep.subr.mxu0 0.0
  %315 = vmatpush1.msra.mxu0 0.0
  %316 = vmatprep.subr.mxu0 0.0
  %317 = vmatpush1.msra.mxu0 0.0
  %318 = vmatprep.subr.mxu0 0.0
  %319 = vmatpush1.msra.mxu0 0.0
  %320 = vmatprep.subr.mxu0 0.0
  %321 = vmatpush1.msra.mxu0 0.0
  %322 = vmatprep.subr.mxu0 0.0
  %323 = vmatpush1.msra.mxu0 0.0
  %324 = vmatprep.subr.mxu0 0.0
  %325 = vmatpush1.msra.mxu0 0.0
  %326 = vmatprep.subr.mxu0 0.0
  %327 = vmatpush1.msra.mxu0 0.0
  %328 = vmatprep.subr.mxu0 0.0
  %329 = vmatpush1.msra.mxu0 0.0
  %330 = vmatprep.mubr.f32.mxu0 0.0
  %331 = vmatmul.mubr.f32.gmra.mrb[0].mxu0 %v264
  %v332 = vpop.f32.mrb[0].mxu0
  %v333 = vadd.f32 0.0, %v332
  %v334 = vpop.f32.mrb[0].mxu0
  %v335 = vadd.f32 0.0, %v334
  %336 = vdwg.mxu0
  %337 = vmatprep.subr.mxu0 %v225
  %338 = vmatpush1.msra.mxu0 %v224
  %339 = vmatprep.subr.mxu0 %v229
  %340 = vmatpush1.msra.mxu0 %v228
  %341 = vmatprep.subr.mxu0 %v233
  %342 = vmatpush1.msra.mxu0 %v232
  %343 = vmatprep.subr.mxu0 %v237
  %344 = vmatpush1.msra.mxu0 %v236
  %345 = vmatprep.subr.mxu0 %v241
  %346 = vmatpush1.msra.mxu0 %v240
  %347 = vmatprep.subr.mxu0 %v245
  %348 = vmatpush1.msra.mxu0 %v244
  %349 = vmatprep.subr.mxu0 %v249
  %350 = vmatpush1.msra.mxu0 %v248
  %351 = vmatprep.subr.mxu0 %v253
  %352 = vmatpush1.msra.mxu0 %v252
  %353 = vmatprep.subr.mxu0 %v257
  %354 = vmatpush1.msra.mxu0 %v256
  %355 = vmatprep.subr.mxu0 %v261
  %356 = vmatpush1.msra.mxu0 %v260
  %357 = vmatprep.subr.mxu0 0.0
  %358 = vmatpush1.msra.mxu0 0.0
  %359 = vmatprep.subr.mxu0 0.0
  %360 = vmatpush1.msra.mxu0 0.0
  %361 = vmatprep.subr.mxu0 0.0
  %362 = vmatpush1.msra.mxu0 0.0
  %363 = vmatprep.subr.mxu0 0.0
  %364 = vmatpush1.msra.mxu0 0.0
  %365 = vmatprep.subr.mxu0 0.0
  %366 = vmatpush1.msra.mxu0 0.0
  %367 = vmatprep.subr.mxu0 0.0
  %368 = vmatpush1.msra.mxu0 0.0
  %369 = vmatprep.subr.mxu0 0.0
  %370 = vmatpush1.msra.mxu0 0.0
  %371 = vmatprep.subr.mxu0 0.0
  %372 = vmatpush1.msra.mxu0 0.0
  %373 = vmatprep.subr.mxu0 0.0
  %374 = vmatpush1.msra.mxu0 0.0
  %375 = vmatprep.subr.mxu0 0.0
  %376 = vmatpush1.msra.mxu0 0.0
  %377 = vmatprep.subr.mxu0 0.0
  %378 = vmatpush1.msra.mxu0 0.0
  %379 = vmatprep.subr.mxu0 0.0
  %380 = vmatpush1.msra.mxu0 0.0
  %381 = vmatprep.subr.mxu0 0.0
  %382 = vmatpush1.msra.mxu0 0.0
  %383 = vmatprep.subr.mxu0 0.0
  %384 = vmatpush1.msra.mxu0 0.0
  %385 = vmatprep.subr.mxu0 0.0
  %386 = vmatpush1.msra.mxu0 0.0
  %387 = vmatprep.subr.mxu0 0.0
  %388 = vmatpush1.msra.mxu0 0.0
  %389 = vmatprep.subr.mxu0 0.0
  %390 = vmatpush1.msra.mxu0 0.0
  %391 = vmatprep.subr.mxu0 0.0
  %392 = vmatpush1.msra.mxu0 0.0
  %393 = vmatprep.subr.mxu0 0.0
  %394 = vmatpush1.msra.mxu0 0.0
  %395 = vmatprep.subr.mxu0 0.0
  %396 = vmatpush1.msra.mxu0 0.0
  %397 = vmatprep.subr.mxu0 0.0
  %398 = vmatpush1.msra.mxu0 0.0
  %399 = vmatprep.subr.mxu0 0.0
  %400 = vmatpush1.msra.mxu0 0.0
  %401 = vmatprep.mubr.f32.mxu0 0.0
  %402 = vmatmul.mubr.f32.gmra.mrb[0].mxu0 %v264
  %v403 = vpop.f32.mrb[0].mxu0
  %v404 = vadd.f32 0.0, %v403
  %v405 = vpop.f32.mrb[0].mxu0
  %v406 = vadd.f32 0.0, %v405
  %407 = vdwg.mxu0
  %v408 = vmax.f32 %v333, 0.0
  %v409 = vmax.f32 %v335, 0.0
  %v410 = vmax.f32 %v404, 0.0
  %v411 = vmax.f32 %v406, 0.0
  %412 = vrot.lane.b32.xlu0 %v408, 16
  %v413 = vpop.permute.xlu0 %412
  %414 = vrot.lane.b32.xlu0 %v409, 16
  %v415 = vpop.permute.xlu0 %414
  %416 = vrot.lane.b32.xlu0 %v410, 16
  %v417 = vpop.permute.xlu0 %416
  %418 = vrot.lane.b32.xlu0 %v411, 16
  %v419 = vpop.permute.xlu0 %418
  %v420 = vsel %vm61, %v417, %v419
  %v421 = vsel %vm61, %v415, %v417
  %v422 = vsel %vm61, %v413, %v415
  %v423 = vsel %vm61, %v419, %v413
  %v424 = vsel %vm28, %v423, 0.0
  %v425 = vsel %vm29, %v422, 0.0
  %v426 = vsel %vm30, %v421, 0.0
  %v427 = vsel %vm31, %v420, 0.0
  %428 = vrot.lane.b32.xlu0 %v424, 1
  %v429 = vpop.permute.xlu0 %428
  %430 = vrot.lane.b32.xlu0 %v425, 1
  %v431 = vpop.permute.xlu0 %430
  %432 = vrot.lane.b32.xlu0 %v426, 1
  %v433 = vpop.permute.xlu0 %432
  %434 = vrot.lane.b32.xlu0 %v427, 1
  %v435 = vpop.permute.xlu0 %434
  %v436 = vsel %vm78, %v433, %v435
  %v437 = vsel %vm78, %v431, %v433
  %v438 = vsel %vm78, %v429, %v431
  %v439 = vsel %vm78, %v435, %v429
  %v440 = vsel %vm36, %v439, 0.0
  %v441 = vsel %vm37, %v438, 0.0
  %v442 = vsel %vm38, %v437, 0.0
  %v443 = vsel %vm39, %v436, 0.0
  %444 = vst [vmem:[#allocation2] sm:$0xff] %v440
  %445 = vst [vmem:[#allocation2 + $0x8] sm:$0xff] %v441
  %446 = vst [vmem:[#allocation2 + $0x10] sm:$0xff] %v442
  %447 = vst [vmem:[#allocation2 + $0x18] sm:$0xff] %v443
  %448 = vst [vmem:[#allocation2 + $0x20] sm:$0xff] %v424
  %449 = vst [vmem:[#allocation2 + $0x28] sm:$0xff] %v425
  %450 = vst [vmem:[#allocation2 + $0x30] sm:$0xff] %v426
  %451 = vst [vmem:[#allocation2 + $0x38] sm:$0xff] %v427
  %452 = vrot.lane.b32.xlu0 %v424, 127
  %v453 = vpop.permute.xlu0 %452
  %454 = vrot.lane.b32.xlu0 %v425, 127
  %v455 = vpop.permute.xlu0 %454
  %456 = vrot.lane.b32.xlu0 %v426, 127
  %v457 = vpop.permute.xlu0 %456
  %458 = vrot.lane.b32.xlu0 %v427, 127
  %v459 = vpop.permute.xlu0 %458
  %v460 = vsel %vm103, %v457, %v459
  %v461 = vsel %vm103, %v455, %v457
  %v462 = vsel %vm103, %v453, %v455
  %v463 = vsel %vm103, %v459, %v453
  %v464 = vsel %vm40, %v462, 0.0
  %v465 = vsel %vm41, %v461, 0.0
  %v466 = vsel %vm42, %v460, 0.0
  %v467 = vsel %vm43, %v463, 0.0
  %468 = vst [vmem:[#allocation2 + $0x40] sm:$0xff] %v464
  %469 = vst [vmem:[#allocation2 + $0x48] sm:$0xff] %v465
  %470 = vst [vmem:[#allocation2 + $0x50] sm:$0xff] %v466
  %471 = vst [vmem:[#allocation2 + $0x58] sm:$0xff] %v467
  %472 = vrot.lane.b32.xlu0 %v408, 1
  %v473 = vpop.permute.xlu0 %472
  %474 = vrot.lane.b32.xlu0 %v409, 1
  %v475 = vpop.permute.xlu0 %474
  %476 = vrot.lane.b32.xlu0 %v410, 1
  %v477 = vpop.permute.xlu0 %476
  %478 = vrot.lane.b32.xlu0 %v411, 1
  %v479 = vpop.permute.xlu0 %478
  %v480 = vsel %vm78, %v477, %v479
  %v481 = vsel %vm78, %v475, %v477
  %v482 = vsel %vm78, %v473, %v475
  %v483 = vsel %vm78, %v479, %v473
  %v484 = vsel %vm36, %v483, 0.0
  %v485 = vsel %vm37, %v482, 0.0
  %v486 = vsel %vm38, %v481, 0.0
  %v487 = vsel %vm39, %v480, 0.0
  %488 = vst [vmem:[#allocation2 + $0x60] sm:$0xff] %v484
  %489 = vst [vmem:[#allocation2 + $0x68] sm:$0xff] %v485
  %490 = vst [vmem:[#allocation2 + $0x70] sm:$0xff] %v486
  %491 = vst [vmem:[#allocation2 + $0x78] sm:$0xff] %v487
  %492 = vst [vmem:[#allocation2 + $0x80] sm:$0xff] %v408
  %493 = vst [vmem:[#allocation2 + $0x88] sm:$0xff] %v409
  %494 = vst [vmem:[#allocation2 + $0x90] sm:$0xff] %v410
  %495 = vst [vmem:[#allocation2 + $0x98] sm:$0xff] %v411
  %496 = vrot.lane.b32.xlu0 %v408, 127
  %v497 = vpop.permute.xlu0 %496
  %498 = vrot.lane.b32.xlu0 %v409, 127
  %v499 = vpop.permute.xlu0 %498
  %500 = vrot.lane.b32.xlu0 %v410, 127
  %v501 = vpop.permute.xlu0 %500
  %502 = vrot.lane.b32.xlu0 %v411, 127
  %v503 = vpop.permute.xlu0 %502
  %v504 = vsel %vm103, %v501, %v503
  %v505 = vsel %vm103, %v499, %v501
  %v506 = vsel %vm103, %v497, %v499
  %v507 = vsel %vm103, %v503, %v497
  %v508 = vsel %vm40, %v506, 0.0
  %v509 = vsel %vm41, %v505, 0.0
  %v510 = vsel %vm42, %v504, 0.0
  %v511 = vsel %vm43, %v507, 0.0
  %512 = vst [vmem:[#allocation2 + $0xa0] sm:$0xff] %v508
  %513 = vst [vmem:[#allocation2 + $0xa8] sm:$0xff] %v509
  %514 = vst [vmem:[#allocation2 + $0xb0] sm:$0xff] %v510
  %515 = vst [vmem:[#allocation2 + $0xb8] sm:$0xff] %v511
  %516 = vrot.lane.b32.xlu0 %v408, 112
  %v517 = vpop.permute.xlu0 %516
  %518 = vrot.lane.b32.xlu0 %v409, 112
  %v519 = vpop.permute.xlu0 %518
  %520 = vrot.lane.b32.xlu0 %v410, 112
  %v521 = vpop.permute.xlu0 %520
  %522 = vrot.lane.b32.xlu0 %v411, 112
  %v523 = vpop.permute.xlu0 %522
  %v524 = vsel %vm168, %v521, %v523
  %v525 = vsel %vm168, %v519, %v521
  %v526 = vsel %vm168, %v517, %v519
  %v527 = vsel %vm168, %v523, %v517
  %v528 = vsel %vm32, %v526, 0.0
  %v529 = vsel %vm33, %v525, 0.0
  %v530 = vsel %vm34, %v524, 0.0
  %v531 = vsel %vm35, %v527, 0.0
  %532 = vrot.lane.b32.xlu0 %v528, 1
  %v533 = vpop.permute.xlu0 %532
  %534 = vrot.lane.b32.xlu0 %v529, 1
  %v535 = vpop.permute.xlu0 %534
  %536 = vrot.lane.b32.xlu0 %v530, 1
  %v537 = vpop.permute.xlu0 %536
  %538 = vrot.lane.b32.xlu0 %v531, 1
  %v539 = vpop.permute.xlu0 %538
  %v540 = vsel %vm78, %v537, %v539
  %v541 = vsel %vm78, %v535, %v537
  %v542 = vsel %vm78, %v533, %v535
  %v543 = vsel %vm78, %v539, %v533
  %v544 = vsel %vm36, %v543, 0.0
  %v545 = vsel %vm37, %v542, 0.0
  %v546 = vsel %vm38, %v541, 0.0
  %v547 = vsel %vm39, %v540, 0.0
  %548 = vst [vmem:[#allocation2 + $0xc0] sm:$0xff] %v544
  %549 = vst [vmem:[#allocation2 + $0xc8] sm:$0xff] %v545
  %550 = vst [vmem:[#allocation2 + $0xd0] sm:$0xff] %v546
  %551 = vst [vmem:[#allocation2 + $0xd8] sm:$0xff] %v547
  %552 = vst [vmem:[#allocation2 + $0xe0] sm:$0xff] %v528
  %553 = vst [vmem:[#allocation2 + $0xe8] sm:$0xff] %v529
  %554 = vst [vmem:[#allocation2 + $0xf0] sm:$0xff] %v530
  %555 = vst [vmem:[#allocation2 + $0xf8] sm:$0xff] %v531
  %556 = vrot.lane.b32.xlu0 %v528, 127
  %v557 = vpop.permute.xlu0 %556
  %558 = vrot.lane.b32.xlu0 %v529, 127
  %v559 = vpop.permute.xlu0 %558
  %560 = vrot.lane.b32.xlu0 %v530, 127
  %v561 = vpop.permute.xlu0 %560
  %562 = vrot.lane.b32.xlu0 %v531, 127
  %v563 = vpop.permute.xlu0 %562
  %v564 = vsel %vm103, %v561, %v563
  %v565 = vsel %vm103, %v559, %v561
  %v566 = vsel %vm103, %v557, %v559
  %v567 = vsel %vm103, %v563, %v557
  %v568 = vsel %vm40, %v566, 0.0
  %v569 = vsel %vm41, %v565, 0.0
  %v570 = vsel %vm42, %v564, 0.0
  %v571 = vsel %vm43, %v567, 0.0
  %572 = vst [vmem:[#allocation2 + $0x100] sm:$0xff] %v568
  %573 = vst [vmem:[#allocation2 + $0x108] sm:$0xff] %v569
  %574 = vst [vmem:[#allocation2 + $0x110] sm:$0xff] %v570
  %575 = vst [vmem:[#allocation2 + $0x118] sm:$0xff] %v571
  %v576 = vld [vmem:[%s1 + $0x8] sm:$0xff]
  %v577 = vld [vmem:[#allocation2] sm:$0xff]
  %v578 = vld [vmem:[#allocation2 + $0x8] sm:$0xff]
  %v579 = vld [vmem:[#allocation2 + $0x10] sm:$0xff]
  %v580 = vld [vmem:[#allocation2 + $0x18] sm:$0xff]
  %v581 = vld [vmem:[#allocation2 + $0x20] sm:$0xff]
  %v582 = vld [vmem:[#allocation2 + $0x28] sm:$0xff]
  %v583 = vld [vmem:[#allocation2 + $0x30] sm:$0xff]
  %v584 = vld [vmem:[#allocation2 + $0x38] sm:$0xff]
  %v585 = vld [vmem:[#allocation2 + $0x40] sm:$0xff]
  %v586 = vld [vmem:[#allocation2 + $0x48] sm:$0xff]
  %v587 = vld [vmem:[#allocation2 + $0x50] sm:$0xff]
  %v588 = vld [vmem:[#allocation2 + $0x58] sm:$0xff]
  %v589 = vld [vmem:[#allocation2 + $0x60] sm:$0xff]
  %v590 = vld [vmem:[#allocation2 + $0x68] sm:$0xff]
  %v591 = vld [vmem:[#allocation2 + $0x70] sm:$0xff]
  %v592 = vld [vmem:[#allocation2 + $0x78] sm:$0xff]
  %v593 = vld [vmem:[#allocation2 + $0x80] sm:$0xff]
  %v594 = vld [vmem:[#allocation2 + $0x88] sm:$0xff]
  %v595 = vld [vmem:[#allocation2 + $0x90] sm:$0xff]
  %v596 = vld [vmem:[#allocation2 + $0x98] sm:$0xff]
  %v597 = vld [vmem:[#allocation2 + $0xa0] sm:$0xff]
  %v598 = vld [vmem:[#allocation2 + $0xa8] sm:$0xff]
  %v599 = vld [vmem:[#allocation2 + $0xb0] sm:$0xff]
  %v600 = vld [vmem:[#allocation2 + $0xb8] sm:$0xff]
  %v601 = vld [vmem:[#allocation2 + $0xc0] sm:$0xff]
  %v602 = vld [vmem:[#allocation2 + $0xc8] sm:$0xff]
  %v603 = vld [vmem:[#allocation2 + $0xd0] sm:$0xff]
  %v604 = vld [vmem:[#allocation2 + $0xd8] sm:$0xff]
  %v605 = vld [vmem:[#allocation2 + $0xe0] sm:$0xff]
  %v606 = vld [vmem:[#allocation2 + $0xe8] sm:$0xff]
  %v607 = vld [vmem:[#allocation2 + $0xf0] sm:$0xff]
  %v608 = vld [vmem:[#allocation2 + $0xf8] sm:$0xff]
  %v609 = vld [vmem:[#allocation2 + $0x100] sm:$0xff]
  %v610 = vld [vmem:[#allocation2 + $0x108] sm:$0xff]
  %v611 = vld [vmem:[#allocation2 + $0x110] sm:$0xff]
  %v612 = vld [vmem:[#allocation2 + $0x118] sm:$0xff]
  %v613 = vld [vmem:[#allocation2 + $0x120] sm:$0xff]
  %v614 = vld [vmem:[#allocation2 + $0x128] sm:$0xff]
  %v615 = vld [vmem:[#allocation2 + $0x130] sm:$0xff]
  %v616 = vld [vmem:[#allocation2 + $0x138] sm:$0xff]
  %v618 = vsel %vm262, %v576, 0
  %620 = vmatprep.subr.mxu0 %v578
  %621 = vmatpush1.msra.mxu0 %v577
  %622 = vmatprep.subr.mxu0 %v582
  %623 = vmatpush1.msra.mxu0 %v581
  %624 = vmatprep.subr.mxu0 %v586
  %625 = vmatpush1.msra.mxu0 %v585
  %626 = vmatprep.subr.mxu0 %v590
  %627 = vmatpush1.msra.mxu0 %v589
  %628 = vmatprep.subr.mxu0 %v594
  %629 = vmatpush1.msra.mxu0 %v593
  %630 = vmatprep.subr.mxu0 %v598
  %631 = vmatpush1.msra.mxu0 %v597
  %632 = vmatprep.subr.mxu0 %v602
  %633 = vmatpush1.msra.mxu0 %v601
  %634 = vmatprep.subr.mxu0 %v606
  %635 = vmatpush1.msra.mxu0 %v605
  %636 = vmatprep.subr.mxu0 %v610
  %637 = vmatpush1.msra.mxu0 %v609
  %638 = vmatprep.subr.mxu0 %v614
  %639 = vmatpush1.msra.mxu0 %v613
  %640 = vmatprep.subr.mxu0 0.0
  %641 = vmatpush1.msra.mxu0 0.0
  %642 = vmatprep.subr.mxu0 0.0
  %643 = vmatpush1.msra.mxu0 0.0
  %644 = vmatprep.subr.mxu0 0.0
  %645 = vmatpush1.msra.mxu0 0.0
  %646 = vmatprep.subr.mxu0 0.0
  %647 = vmatpush1.msra.mxu0 0.0
  %648 = vmatprep.subr.mxu0 0.0
  %649 = vmatpush1.msra.mxu0 0.0
  %650 = vmatprep.subr.mxu0 0.0
  %651 = vmatpush1.msra.mxu0 0.0
  %652 = vmatprep.subr.mxu0 0.0
  %653 = vmatpush1.msra.mxu0 0.0
  %654 = vmatprep.subr.mxu0 0.0
  %655 = vmatpush1.msra.mxu0 0.0
  %656 = vmatprep.subr.mxu0 0.0
  %657 = vmatpush1.msra.mxu0 0.0
  %658 = vmatprep.subr.mxu0 0.0
  %659 = vmatpush1.msra.mxu0 0.0
  %660 = vmatprep.subr.mxu0 0.0
  %661 = vmatpush1.msra.mxu0 0.0
  %662 = vmatprep.subr.mxu0 0.0
  %663 = vmatpush1.msra.mxu0 0.0
  %664 = vmatprep.subr.mxu0 0.0
  %665 = vmatpush1.msra.mxu0 0.0
  %666 = vmatprep.subr.mxu0 0.0
  %667 = vmatpush1.msra.mxu0 0.0
  %668 = vmatprep.subr.mxu0 0.0
  %669 = vmatpush1.msra.mxu0 0.0
  %670 = vmatprep.subr.mxu0 0.0
  %671 = vmatpush1.msra.mxu0 0.0
  %672 = vmatprep.subr.mxu0 0.0
  %673 = vmatpush1.msra.mxu0 0.0
  %674 = vmatprep.subr.mxu0 0.0
  %675 = vmatpush1.msra.mxu0 0.0
  %676 = vmatprep.subr.mxu0 0.0
  %677 = vmatpush1.msra.mxu0 0.0
  %678 = vmatprep.subr.mxu0 0.0
  %679 = vmatpush1.msra.mxu0 0.0
  %680 = vmatprep.subr.mxu0 0.0
  %681 = vmatpush1.msra.mxu0 0.0
  %682 = vmatprep.subr.mxu0 0.0
  %683 = vmatpush1.msra.mxu0 0.0
  %684 = vmatprep.mubr.f32.mxu0 0.0
  %685 = vmatmul.mubr.f32.gmra.mrb[0].mxu0 %v618
  %v686 = vpop.f32.mrb[0].mxu0
  %v687 = vadd.f32 0.0, %v686
  %v688 = vpop.f32.mrb[0].mxu0
  %v689 = vadd.f32 0.0, %v688
  %690 = vdwg.mxu0
  %691 = vmatprep.subr.mxu0 %v580
  %692 = vmatpush1.msra.mxu0 %v579
  %693 = vmatprep.subr.mxu0 %v584
  %694 = vmatpush1.msra.mxu0 %v583
  %695 = vmatprep.subr.mxu0 %v588
  %696 = vmatpush1.msra.mxu0 %v587
  %697 = vmatprep.subr.mxu0 %v592
  %698 = vmatpush1.msra.mxu0 %v591
  %699 = vmatprep.subr.mxu0 %v596
  %700 = vmatpush1.msra.mxu0 %v595
  %701 = vmatprep.subr.mxu0 %v600
  %702 = vmatpush1.msra.mxu0 %v599
  %703 = vmatprep.subr.mxu0 %v604
  %704 = vmatpush1.msra.mxu0 %v603
  %705 = vmatprep.subr.mxu0 %v608
  %706 = vmatpush1.msra.mxu0 %v607
  %707 = vmatprep.subr.mxu0 %v612
  %708 = vmatpush1.msra.mxu0 %v611
  %709 = vmatprep.subr.mxu0 %v616
  %710 = vmatpush1.msra.mxu0 %v615
  %711 = vmatprep.subr.mxu0 0.0
  %712 = vmatpush1.msra.mxu0 0.0
  %713 = vmatprep.subr.mxu0 0.0
  %714 = vmatpush1.msra.mxu0 0.0
  %715 = vmatprep.subr.mxu0 0.0
  %716 = vmatpush1.msra.mxu0 0.0
  %717 = vmatprep.subr.mxu0 0.0
  %718 = vmatpush1.msra.mxu0 0.0
  %719 = vmatprep.subr.mxu0 0.0
  %720 = vmatpush1.msra.mxu0 0.0
  %721 = vmatprep.subr.mxu0 0.0
  %722 = vmatpush1.msra.mxu0 0.0
  %723 = vmatprep.subr.mxu0 0.0
  %724 = vmatpush1.msra.mxu0 0.0
  %725 = vmatprep.subr.mxu0 0.0
  %726 = vmatpush1.msra.mxu0 0.0
  %727 = vmatprep.subr.mxu0 0.0
  %728 = vmatpush1.msra.mxu0 0.0
  %729 = vmatprep.subr.mxu0 0.0
  %730 = vmatpush1.msra.mxu0 0.0
  %731 = vmatprep.subr.mxu0 0.0
  %732 = vmatpush1.msra.mxu0 0.0
  %733 = vmatprep.subr.mxu0 0.0
  %734 = vmatpush1.msra.mxu0 0.0
  %735 = vmatprep.subr.mxu0 0.0
  %736 = vmatpush1.msra.mxu0 0.0
  %737 = vmatprep.subr.mxu0 0.0
  %738 = vmatpush1.msra.mxu0 0.0
  %739 = vmatprep.subr.mxu0 0.0
  %740 = vmatpush1.msra.mxu0 0.0
  %741 = vmatprep.subr.mxu0 0.0
  %742 = vmatpush1.msra.mxu0 0.0
  %743 = vmatprep.subr.mxu0 0.0
  %744 = vmatpush1.msra.mxu0 0.0
  %745 = vmatprep.subr.mxu0 0.0
  %746 = vmatpush1.msra.mxu0 0.0
  %747 = vmatprep.subr.mxu0 0.0
  %748 = vmatpush1.msra.mxu0 0.0
  %749 = vmatprep.subr.mxu0 0.0
  %750 = vmatpush1.msra.mxu0 0.0
  %751 = vmatprep.subr.mxu0 0.0
  %752 = vmatpush1.msra.mxu0 0.0
  %753 = vmatprep.subr.mxu0 0.0
  %754 = vmatpush1.msra.mxu0 0.0
  %755 = vmatprep.mubr.f32.mxu0 0.0
  %756 = vmatmul.mubr.f32.gmra.mrb[0].mxu0 %v618
  %v757 = vpop.f32.mrb[0].mxu0
  %v758 = vadd.f32 0.0, %v757
  %v759 = vpop.f32.mrb[0].mxu0
  %v760 = vadd.f32 0.0, %v759
  %761 = vdwg.mxu0
  %v762 = vadd.f32 %v11, %v687
  %v763 = vadd.f32 %v12, %v689
  %v764 = vadd.f32 %v13, %v758
  %v765 = vadd.f32 %v14, %v760
  %v766 = vmax.f32 %v762, 0.0
  %v767 = vmax.f32 %v763, 0.0
  %v768 = vmax.f32 %v764, 0.0
  %v769 = vmax.f32 %v765, 0.0
  %770 = vrot.lane.b32.xlu0 %v766, 16
  %v771 = vpop.permute.xlu0 %770
  %772 = vrot.lane.b32.xlu0 %v767, 16
  %v773 = vpop.permute.xlu0 %772
  %774 = vrot.lane.b32.xlu0 %v768, 16
  %v775 = vpop.permute.xlu0 %774
  %776 = vrot.lane.b32.xlu0 %v769, 16
  %v777 = vpop.permute.xlu0 %776
  %v778 = vsel %vm61, %v775, %v777
  %v779 = vsel %vm61, %v773, %v775
  %v780 = vsel %vm61, %v771, %v773
  %v781 = vsel %vm61, %v777, %v771
  %v782 = vsel %vm28, %v781, 0.0
  %v783 = vsel %vm29, %v780, 0.0
  %v784 = vsel %vm30, %v779, 0.0
  %v785 = vsel %vm31, %v778, 0.0
  %786 = vrot.lane.b32.xlu0 %v782, 1
  %v787 = vpop.permute.xlu0 %786
  %788 = vrot.lane.b32.xlu0 %v783, 1
  %v789 = vpop.permute.xlu0 %788
  %790 = vrot.lane.b32.xlu0 %v784, 1
  %v791 = vpop.permute.xlu0 %790
  %792 = vrot.lane.b32.xlu0 %v785, 1
  %v793 = vpop.permute.xlu0 %792
  %v794 = vsel %vm78, %v791, %v793
  %v795 = vsel %vm78, %v789, %v791
  %v796 = vsel %vm78, %v787, %v789
  %v797 = vsel %vm78, %v793, %v787
  %v798 = vsel %vm36, %v797, 0.0
  %v799 = vsel %vm37, %v796, 0.0
  %v800 = vsel %vm38, %v795, 0.0
  %v801 = vsel %vm39, %v794, 0.0
  %802 = vst [vmem:[#allocation2] sm:$0xff] %v798
  %803 = vst [vmem:[#allocation2 + $0x8] sm:$0xff] %v799
  %804 = vst [vmem:[#allocation2 + $0x10] sm:$0xff] %v800
  %805 = vst [vmem:[#allocation2 + $0x18] sm:$0xff] %v801
  %806 = vst [vmem:[#allocation2 + $0x20] sm:$0xff] %v782
  %807 = vst [vmem:[#allocation2 + $0x28] sm:$0xff] %v783
  %808 = vst [vmem:[#allocation2 + $0x30] sm:$0xff] %v784
  %809 = vst [vmem:[#allocation2 + $0x38] sm:$0xff] %v785
  %810 = vrot.lane.b32.xlu0 %v782, 127
  %v811 = vpop.permute.xlu0 %810
  %812 = vrot.lane.b32.xlu0 %v783, 127
  %v813 = vpop.permute.xlu0 %812
  %814 = vrot.lane.b32.xlu0 %v784, 127
  %v815 = vpop.permute.xlu0 %814
  %816 = vrot.lane.b32.xlu0 %v785, 127
  %v817 = vpop.permute.xlu0 %816
  %v818 = vsel %vm103, %v815, %v817
  %v819 = vsel %vm103, %v813, %v815
  %v820 = vsel %vm103, %v811, %v813
  %v821 = vsel %vm103, %v817, %v811
  %v822 = vsel %vm40, %v820, 0.0
  %v823 = vsel %vm41, %v819, 0.0
  %v824 = vsel %vm42, %v818, 0.0
  %v825 = vsel %vm43, %v821, 0.0
  %826 = vst [vmem:[#allocation2 + $0x40] sm:$0xff] %v822
  %827 = vst [vmem:[#allocation2 + $0x48] sm:$0xff] %v823
  %828 = vst [vmem:[#allocation2 + $0x50] sm:$0xff] %v824
  %829 = vst [vmem:[#allocation2 + $0x58] sm:$0xff] %v825
  %830 = vrot.lane.b32.xlu0 %v766, 1
  %v831 = vpop.permute.xlu0 %830
  %832 = vrot.lane.b32.xlu0 %v767, 1
  %v833 = vpop.permute.xlu0 %832
  %834 = vrot.lane.b32.xlu0 %v768, 1
  %v835 = vpop.permute.xlu0 %834
  %836 = vrot.lane.b32.xlu0 %v769, 1
  %v837 = vpop.permute.xlu0 %836
  %v838 = vsel %vm78, %v835, %v837
  %v839 = vsel %vm78, %v833, %v835
  %v840 = vsel %vm78, %v831, %v833
  %v841 = vsel %vm78, %v837, %v831
  %v842 = vsel %vm36, %v841, 0.0
  %v843 = vsel %vm37, %v840, 0.0
  %v844 = vsel %vm38, %v839, 0.0
  %v845 = vsel %vm39, %v838, 0.0
  %846 = vst [vmem:[#allocation2 + $0x60] sm:$0xff] %v842
  %847 = vst [vmem:[#allocation2 + $0x68] sm:$0xff] %v843
  %848 = vst [vmem:[#allocation2 + $0x70] sm:$0xff] %v844
  %849 = vst [vmem:[#allocation2 + $0x78] sm:$0xff] %v845
  %850 = vst [vmem:[#allocation2 + $0x80] sm:$0xff] %v766
  %851 = vst [vmem:[#allocation2 + $0x88] sm:$0xff] %v767
  %852 = vst [vmem:[#allocation2 + $0x90] sm:$0xff] %v768
  %853 = vst [vmem:[#allocation2 + $0x98] sm:$0xff] %v769
  %854 = vrot.lane.b32.xlu0 %v766, 127
  %v855 = vpop.permute.xlu0 %854
  %856 = vrot.lane.b32.xlu0 %v767, 127
  %v857 = vpop.permute.xlu0 %856
  %858 = vrot.lane.b32.xlu0 %v768, 127
  %v859 = vpop.permute.xlu0 %858
  %860 = vrot.lane.b32.xlu0 %v769, 127
  %v861 = vpop.permute.xlu0 %860
  %v862 = vsel %vm103, %v859, %v861
  %v863 = vsel %vm103, %v857, %v859
  %v864 = vsel %vm103, %v855, %v857
  %v865 = vsel %vm103, %v861, %v855
  %v866 = vsel %vm40, %v864, 0.0
  %v867 = vsel %vm41, %v863, 0.0
  %v868 = vsel %vm42, %v862, 0.0
  %v869 = vsel %vm43, %v865, 0.0
  %870 = vst [vmem:[#allocation2 + $0xa0] sm:$0xff] %v866
  %871 = vst [vmem:[#allocation2 + $0xa8] sm:$0xff] %v867
  %872 = vst [vmem:[#allocation2 + $0xb0] sm:$0xff] %v868
  %873 = vst [vmem:[#allocation2 + $0xb8] sm:$0xff] %v869
  %874 = vrot.lane.b32.xlu0 %v766, 112
  %v875 = vpop.permute.xlu0 %874
  %876 = vrot.lane.b32.xlu0 %v767, 112
  %v877 = vpop.permute.xlu0 %876
  %878 = vrot.lane.b32.xlu0 %v768, 112
  %v879 = vpop.permute.xlu0 %878
  %880 = vrot.lane.b32.xlu0 %v769, 112
  %v881 = vpop.permute.xlu0 %880
  %v882 = vsel %vm168, %v879, %v881
  %v883 = vsel %vm168, %v877, %v879
  %v884 = vsel %vm168, %v875, %v877
  %v885 = vsel %vm168, %v881, %v875
  %v886 = vsel %vm32, %v884, 0.0
  %v887 = vsel %vm33, %v883, 0.0
  %v888 = vsel %vm34, %v882, 0.0
  %v889 = vsel %vm35, %v885, 0.0
  %890 = vrot.lane.b32.xlu0 %v886, 1
  %v891 = vpop.permute.xlu0 %890
  %892 = vrot.lane.b32.xlu0 %v887, 1
  %v893 = vpop.permute.xlu0 %892
  %894 = vrot.lane.b32.xlu0 %v888, 1
  %v895 = vpop.permute.xlu0 %894
  %896 = vrot.lane.b32.xlu0 %v889, 1
  %v897 = vpop.permute.xlu0 %896
  %v898 = vsel %vm78, %v895, %v897
  %v899 = vsel %vm78, %v893, %v895
  %v900 = vsel %vm78, %v891, %v893
  %v901 = vsel %vm78, %v897, %v891
  %v902 = vsel %vm36, %v901, 0.0
  %v903 = vsel %vm37, %v900, 0.0
  %v904 = vsel %vm38, %v899, 0.0
  %v905 = vsel %vm39, %v898, 0.0
  %906 = vst [vmem:[#allocation2 + $0xc0] sm:$0xff] %v902
  %907 = vst [vmem:[#allocation2 + $0xc8] sm:$0xff] %v903
  %908 = vst [vmem:[#allocation2 + $0xd0] sm:$0xff] %v904
  %909 = vst [vmem:[#allocation2 + $0xd8] sm:$0xff] %v905
  %910 = vst [vmem:[#allocation2 + $0xe0] sm:$0xff] %v886
  %911 = vst [vmem:[#allocation2 + $0xe8] sm:$0xff] %v887
  %912 = vst [vmem:[#allocation2 + $0xf0] sm:$0xff] %v888
  %913 = vst [vmem:[#allocation2 + $0xf8] sm:$0xff] %v889
  %914 = vrot.lane.b32.xlu0 %v886, 127
  %v915 = vpop.permute.xlu0 %914
  %916 = vrot.lane.b32.xlu0 %v887, 127
  %v917 = vpop.permute.xlu0 %916
  %918 = vrot.lane.b32.xlu0 %v888, 127
  %v919 = vpop.permute.xlu0 %918
  %920 = vrot.lane.b32.xlu0 %v889, 127
  %v921 = vpop.permute.xlu0 %920
  %v922 = vsel %vm103, %v919, %v921
  %v923 = vsel %vm103, %v917, %v919
  %v924 = vsel %vm103, %v915, %v917
  %v925 = vsel %vm103, %v921, %v915
  %v926 = vsel %vm40, %v924, 0.0
  %v927 = vsel %vm41, %v923, 0.0
  %v928 = vsel %vm42, %v922, 0.0
  %v929 = vsel %vm43, %v925, 0.0
  %930 = vst [vmem:[#allocation2 + $0x100] sm:$0xff] %v926
  %931 = vst [vmem:[#allocation2 + $0x108] sm:$0xff] %v927
  %932 = vst [vmem:[#allocation2 + $0x110] sm:$0xff] %v928
  %933 = vst [vmem:[#allocation2 + $0x118] sm:$0xff] %v929
  %v934 = vld [vmem:[%s1 + $0x10] sm:$0xff]
  %v935 = vld [vmem:[#allocation2] sm:$0xff]
  %v936 = vld [vmem:[#allocation2 + $0x8] sm:$0xff]
  %v937 = vld [vmem:[#allocation2 + $0x10] sm:$0xff]
  %v938 = vld [vmem:[#allocation2 + $0x18] sm:$0xff]
  %v939 = vld [vmem:[#allocation2 + $0x20] sm:$0xff]
  %v940 = vld [vmem:[#allocation2 + $0x28] sm:$0xff]
  %v941 = vld [vmem:[#allocation2 + $0x30] sm:$0xff]
  %v942 = vld [vmem:[#allocation2 + $0x38] sm:$0xff]
  %v943 = vld [vmem:[#allocation2 + $0x40] sm:$0xff]
  %v944 = vld [vmem:[#allocation2 + $0x48] sm:$0xff]
  %v945 = vld [vmem:[#allocation2 + $0x50] sm:$0xff]
  %v946 = vld [vmem:[#allocation2 + $0x58] sm:$0xff]
  %v947 = vld [vmem:[#allocation2 + $0x60] sm:$0xff]
  %v948 = vld [vmem:[#allocation2 + $0x68] sm:$0xff]
  %v949 = vld [vmem:[#allocation2 + $0x70] sm:$0xff]
  %v950 = vld [vmem:[#allocation2 + $0x78] sm:$0xff]
  %v951 = vld [vmem:[#allocation2 + $0x80] sm:$0xff]
  %v952 = vld [vmem:[#allocation2 + $0x88] sm:$0xff]
  %v953 = vld [vmem:[#allocation2 + $0x90] sm:$0xff]
  %v954 = vld [vmem:[#allocation2 + $0x98] sm:$0xff]
  %v955 = vld [vmem:[#allocation2 + $0xa0] sm:$0xff]
  %v956 = vld [vmem:[#allocation2 + $0xa8] sm:$0xff]
  %v957 = vld [vmem:[#allocation2 + $0xb0] sm:$0xff]
  %v958 = vld [vmem:[#allocation2 + $0xb8] sm:$0xff]
  %v959 = vld [vmem:[#allocation2 + $0xc0] sm:$0xff]
  %v960 = vld [vmem:[#allocation2 + $0xc8] sm:$0xff]
  %v961 = vld [vmem:[#allocation2 + $0xd0] sm:$0xff]
  %v962 = vld [vmem:[#allocation2 + $0xd8] sm:$0xff]
  %v963 = vld [vmem:[#allocation2 + $0xe0] sm:$0xff]
  %v964 = vld [vmem:[#allocation2 + $0xe8] sm:$0xff]
  %v965 = vld [vmem:[#allocation2 + $0xf0] sm:$0xff]
  %v966 = vld [vmem:[#allocation2 + $0xf8] sm:$0xff]
  %v967 = vld [vmem:[#allocation2 + $0x100] sm:$0xff]
  %v968 = vld [vmem:[#allocation2 + $0x108] sm:$0xff]
  %v969 = vld [vmem:[#allocation2 + $0x110] sm:$0xff]
  %v970 = vld [vmem:[#allocation2 + $0x118] sm:$0xff]
  %v971 = vld [vmem:[#allocation2 + $0x120] sm:$0xff]
  %v972 = vld [vmem:[#allocation2 + $0x128] sm:$0xff]
  %v973 = vld [vmem:[#allocation2 + $0x130] sm:$0xff]
  %v974 = vld [vmem:[#allocation2 + $0x138] sm:$0xff]
  %v976 = vsel %vm262, %v934, 0
  %978 = vmatprep.subr.mxu0 %v936
  %979 = vmatpush1.msra.mxu0 %v935
  %980 = vmatprep.subr.mxu0 %v940
  %981 = vmatpush1.msra.mxu0 %v939
  %982 = vmatprep.subr.mxu0 %v944
  %983 = vmatpush1.msra.mxu0 %v943
  %984 = vmatprep.subr.mxu0 %v948
  %985 = vmatpush1.msra.mxu0 %v947
  %986 = vmatprep.subr.mxu0 %v952
  %987 = vmatpush1.msra.mxu0 %v951
  %988 = vmatprep.subr.mxu0 %v956
  %989 = vmatpush1.msra.mxu0 %v955
  %990 = vmatprep.subr.mxu0 %v960
  %991 = vmatpush1.msra.mxu0 %v959
  %992 = vmatprep.subr.mxu0 %v964
  %993 = vmatpush1.msra.mxu0 %v963
  %994 = vmatprep.subr.mxu0 %v968
  %995 = vmatpush1.msra.mxu0 %v967
  %996 = vmatprep.subr.mxu0 %v972
  %997 = vmatpush1.msra.mxu0 %v971
  %998 = vmatprep.subr.mxu0 0.0
  %999 = vmatpush1.msra.mxu0 0.0
  %1000 = vmatprep.subr.mxu0 0.0
  %1001 = vmatpush1.msra.mxu0 0.0
  %1002 = vmatprep.subr.mxu0 0.0
  %1003 = vmatpush1.msra.mxu0 0.0
  %1004 = vmatprep.subr.mxu0 0.0
  %1005 = vmatpush1.msra.mxu0 0.0
  %1006 = vmatprep.subr.mxu0 0.0
  %1007 = vmatpush1.msra.mxu0 0.0
  %1008 = vmatprep.subr.mxu0 0.0
  %1009 = vmatpush1.msra.mxu0 0.0
  %1010 = vmatprep.subr.mxu0 0.0
  %1011 = vmatpush1.msra.mxu0 0.0
  %1012 = vmatprep.subr.mxu0 0.0
  %1013 = vmatpush1.msra.mxu0 0.0
  %1014 = vmatprep.subr.mxu0 0.0
  %1015 = vmatpush1.msra.mxu0 0.0
  %1016 = vmatprep.subr.mxu0 0.0
  %1017 = vmatpush1.msra.mxu0 0.0
  %1018 = vmatprep.subr.mxu0 0.0
  %1019 = vmatpush1.msra.mxu0 0.0
  %1020 = vmatprep.subr.mxu0 0.0
  %1021 = vmatpush1.msra.mxu0 0.0
  %1022 = vmatprep.subr.mxu0 0.0
  %1023 = vmatpush1.msra.mxu0 0.0
  %1024 = vmatprep.subr.mxu0 0.0
  %1025 = vmatpush1.msra.mxu0 0.0
  %1026 = vmatprep.subr.mxu0 0.0
  %1027 = vmatpush1.msra.mxu0 0.0
  %1028 = vmatprep.subr.mxu0 0.0
  %1029 = vmatpush1.msra.mxu0 0.0
  %1030 = vmatprep.subr.mxu0 0.0
  %1031 = vmatpush1.msra.mxu0 0.0
  %1032 = vmatprep.subr.mxu0 0.0
  %1033 = vmatpush1.msra.mxu0 0.0
  %1034 = vmatprep.subr.mxu0 0.0
  %1035 = vmatpush1.msra.mxu0 0.0
  %1036 = vmatprep.subr.mxu0 0.0
  %1037 = vmatpush1.msra.mxu0 0.0
  %1038 = vmatprep.subr.mxu0 0.0
  %1039 = vmatpush1.msra.mxu0 0.0
  %1040 = vmatprep.subr.mxu0 0.0
  %1041 = vmatpush1.msra.mxu0 0.0
  %1042 = vmatprep.mubr.f32.mxu0 0.0
  %1043 = vmatmul.mubr.f32.gmra.mrb[0].mxu0 %v976
  %v1044 = vpop.f32.mrb[0].mxu0
  %v1045 = vadd.f32 0.0, %v1044
  %v1046 = vpop.f32.mrb[0].mxu0
  %v1047 = vadd.f32 0.0, %v1046
  %1048 = vdwg.mxu0
  %1049 = vmatprep.subr.mxu0 %v938
  %1050 = vmatpush1.msra.mxu0 %v937
  %1051 = vmatprep.subr.mxu0 %v942
  %1052 = vmatpush1.msra.mxu0 %v941
  %1053 = vmatprep.subr.mxu0 %v946
  %1054 = vmatpush1.msra.mxu0 %v945
  %1055 = vmatprep.subr.mxu0 %v950
  %1056 = vmatpush1.msra.mxu0 %v949
  %1057 = vmatprep.subr.mxu0 %v954
  %1058 = vmatpush1.msra.mxu0 %v953
  %1059 = vmatprep.subr.mxu0 %v958
  %1060 = vmatpush1.msra.mxu0 %v957
  %1061 = vmatprep.subr.mxu0 %v962
  %1062 = vmatpush1.msra.mxu0 %v961
  %1063 = vmatprep.subr.mxu0 %v966
  %1064 = vmatpush1.msra.mxu0 %v965
  %1065 = vmatprep.subr.mxu0 %v970
  %1066 = vmatpush1.msra.mxu0 %v969
  %1067 = vmatprep.subr.mxu0 %v974
  %1068 = vmatpush1.msra.mxu0 %v973
  %1069 = vmatprep.subr.mxu0 0.0
  %1070 = vmatpush1.msra.mxu0 0.0
  %1071 = vmatprep.subr.mxu0 0.0
  %1072 = vmatpush1.msra.mxu0 0.0
  %1073 = vmatprep.subr.mxu0 0.0
  %1074 = vmatpush1.msra.mxu0 0.0
  %1075 = vmatprep.subr.mxu0 0.0
  %1076 = vmatpush1.msra.mxu0 0.0
  %1077 = vmatprep.subr.mxu0 0.0
  %1078 = vmatpush1.msra.mxu0 0.0
  %1079 = vmatprep.subr.mxu0 0.0
  %1080 = vmatpush1.msra.mxu0 0.0
  %1081 = vmatprep.subr.mxu0 0.0
  %1082 = vmatpush1.msra.mxu0 0.0
  %1083 = vmatprep.subr.mxu0 0.0
  %1084 = vmatpush1.msra.mxu0 0.0
  %1085 = vmatprep.subr.mxu0 0.0
  %1086 = vmatpush1.msra.mxu0 0.0
  %1087 = vmatprep.subr.mxu0 0.0
  %1088 = vmatpush1.msra.mxu0 0.0
  %1089 = vmatprep.subr.mxu0 0.0
  %1090 = vmatpush1.msra.mxu0 0.0
  %1091 = vmatprep.subr.mxu0 0.0
  %1092 = vmatpush1.msra.mxu0 0.0
  %1093 = vmatprep.subr.mxu0 0.0
  %1094 = vmatpush1.msra.mxu0 0.0
  %1095 = vmatprep.subr.mxu0 0.0
  %1096 = vmatpush1.msra.mxu0 0.0
  %1097 = vmatprep.subr.mxu0 0.0
  %1098 = vmatpush1.msra.mxu0 0.0
  %1099 = vmatprep.subr.mxu0 0.0
  %1100 = vmatpush1.msra.mxu0 0.0
  %1101 = vmatprep.subr.mxu0 0.0
  %1102 = vmatpush1.msra.mxu0 0.0
  %1103 = vmatprep.subr.mxu0 0.0
  %1104 = vmatpush1.msra.mxu0 0.0
  %1105 = vmatprep.subr.mxu0 0.0
  %1106 = vmatpush1.msra.mxu0 0.0
  %1107 = vmatprep.subr.mxu0 0.0
  %1108 = vmatpush1.msra.mxu0 0.0
  %1109 = vmatprep.subr.mxu0 0.0
  %1110 = vmatpush1.msra.mxu0 0.0
  %1111 = vmatprep.subr.mxu0 0.0
  %1112 = vmatpush1.msra.mxu0 0.0
  %1113 = vmatprep.mubr.f32.mxu0 0.0
  %1114 = vmatmul.mubr.f32.gmra.mrb[0].mxu0 %v976
  %v1115 = vpop.f32.mrb[0].mxu0
  %v1116 = vadd.f32 0.0, %v1115
  %v1117 = vpop.f32.mrb[0].mxu0
  %v1118 = vadd.f32 0.0, %v1117
  %1119 = vdwg.mxu0
  %v1120 = vmax.f32 %v1045, 0.0
  %v1121 = vmax.f32 %v1047, 0.0
  %v1122 = vmax.f32 %v1116, 0.0
  %v1123 = vmax.f32 %v1118, 0.0
  %1124 = vrot.lane.b32.xlu0 %v1120, 16
  %v1125 = vpop.permute.xlu0 %1124
  %1126 = vrot.lane.b32.xlu0 %v1121, 16
  %v1127 = vpop.permute.xlu0 %1126
  %1128 = vrot.lane.b32.xlu0 %v1122, 16
  %v1129 = vpop.permute.xlu0 %1128
  %1130 = vrot.lane.b32.xlu0 %v1123, 16
  %v1131 = vpop.permute.xlu0 %1130
  %v1132 = vsel %vm61, %v1129, %v1131
  %v1133 = vsel %vm61, %v1127, %v1129
  %v1134 = vsel %vm61, %v1125, %v1127
  %v1135 = vsel %vm61, %v1131, %v1125
  %v1136 = vsel %vm28, %v1135, 0.0
  %v1137 = vsel %vm29, %v1134, 0.0
  %v1138 = vsel %vm30, %v1133, 0.0
  %v1139 = vsel %vm31, %v1132, 0.0
  %1140 = vrot.lane.b32.xlu0 %v1136, 1
  %v1141 = vpop.permute.xlu0 %1140
  %1142 = vrot.lane.b32.xlu0 %v1137, 1
  %v1143 = vpop.permute.xlu0 %1142
  %1144 = vrot.lane.b32.xlu0 %v1138, 1
  %v1145 = vpop.permute.xlu0 %1144
  %1146 = vrot.lane.b32.xlu0 %v1139, 1
  %v1147 = vpop.permute.xlu0 %1146
  %v1148 = vsel %vm78, %v1145, %v1147
  %v1149 = vsel %vm78, %v1143, %v1145
  %v1150 = vsel %vm78, %v1141, %v1143
  %v1151 = vsel %vm78, %v1147, %v1141
  %v1152 = vsel %vm36, %v1151, 0.0
  %v1153 = vsel %vm37, %v1150, 0.0
  %v1154 = vsel %vm38, %v1149, 0.0
  %v1155 = vsel %vm39, %v1148, 0.0
  %1156 = vst [vmem:[#allocation2] sm:$0xff] %v1152
  %1157 = vst [vmem:[#allocation2 + $0x8] sm:$0xff] %v1153
  %1158 = vst [vmem:[#allocation2 + $0x10] sm:$0xff] %v1154
  %1159 = vst [vmem:[#allocation2 + $0x18] sm:$0xff] %v1155
  %1160 = vst [vmem:[#allocation2 + $0x20] sm:$0xff] %v1136
  %1161 = vst [vmem:[#allocation2 + $0x28] sm:$0xff] %v1137
  %1162 = vst [vmem:[#allocation2 + $0x30] sm:$0xff] %v1138
  %1163 = vst [vmem:[#allocation2 + $0x38] sm:$0xff] %v1139
  %1164 = vrot.lane.b32.xlu0 %v1136, 127
  %v1165 = vpop.permute.xlu0 %1164
  %1166 = vrot.lane.b32.xlu0 %v1137, 127
  %v1167 = vpop.permute.xlu0 %1166
  %1168 = vrot.lane.b32.xlu0 %v1138, 127
  %v1169 = vpop.permute.xlu0 %1168
  %1170 = vrot.lane.b32.xlu0 %v1139, 127
  %v1171 = vpop.permute.xlu0 %1170
  %v1172 = vsel %vm103, %v1169, %v1171
  %v1173 = vsel %vm103, %v1167, %v1169
  %v1174 = vsel %vm103, %v1165, %v1167
  %v1175 = vsel %vm103, %v1171, %v1165
  %v1176 = vsel %vm40, %v1174, 0.0
  %v1177 = vsel %vm41, %v1173, 0.0
  %v1178 = vsel %vm42, %v1172, 0.0
  %v1179 = vsel %vm43, %v1175, 0.0
  %1180 = vst [vmem:[#allocation2 + $0x40] sm:$0xff] %v1176
  %1181 = vst [vmem:[#allocation2 + $0x48] sm:$0xff] %v1177
  %1182 = vst [vmem:[#allocation2 + $0x50] sm:$0xff] %v1178
  %1183 = vst [vmem:[#allocation2 + $0x58] sm:$0xff] %v1179
  %1184 = vrot.lane.b32.xlu0 %v1120, 1
  %v1185 = vpop.permute.xlu0 %1184
  %1186 = vrot.lane.b32.xlu0 %v1121, 1
  %v1187 = vpop.permute.xlu0 %1186
  %1188 = vrot.lane.b32.xlu0 %v1122, 1
  %v1189 = vpop.permute.xlu0 %1188
  %1190 = vrot.lane.b32.xlu0 %v1123, 1
  %v1191 = vpop.permute.xlu0 %1190
  %v1192 = vsel %vm78, %v1189, %v1191
  %v1193 = vsel %vm78, %v1187, %v1189
  %v1194 = vsel %vm78, %v1185, %v1187
  %v1195 = vsel %vm78, %v1191, %v1185
  %v1196 = vsel %vm36, %v1195, 0.0
  %v1197 = vsel %vm37, %v1194, 0.0
  %v1198 = vsel %vm38, %v1193, 0.0
  %v1199 = vsel %vm39, %v1192, 0.0
  %1200 = vst [vmem:[#allocation2 + $0x60] sm:$0xff] %v1196
  %1201 = vst [vmem:[#allocation2 + $0x68] sm:$0xff] %v1197
  %1202 = vst [vmem:[#allocation2 + $0x70] sm:$0xff] %v1198
  %1203 = vst [vmem:[#allocation2 + $0x78] sm:$0xff] %v1199
  %1204 = vst [vmem:[#allocation2 + $0x80] sm:$0xff] %v1120
  %1205 = vst [vmem:[#allocation2 + $0x88] sm:$0xff] %v1121
  %1206 = vst [vmem:[#allocation2 + $0x90] sm:$0xff] %v1122
  %1207 = vst [vmem:[#allocation2 + $0x98] sm:$0xff] %v1123
  %1208 = vrot.lane.b32.xlu0 %v1120, 127
  %v1209 = vpop.permute.xlu0 %1208
  %1210 = vrot.lane.b32.xlu0 %v1121, 127
  %v1211 = vpop.permute.xlu0 %1210
  %1212 = vrot.lane.b32.xlu0 %v1122, 127
  %v1213 = vpop.permute.xlu0 %1212
  %1214 = vrot.lane.b32.xlu0 %v1123, 127
  %v1215 = vpop.permute.xlu0 %1214
  %v1216 = vsel %vm103, %v1213, %v1215
  %v1217 = vsel %vm103, %v1211, %v1213
  %v1218 = vsel %vm103, %v1209, %v1211
  %v1219 = vsel %vm103, %v1215, %v1209
  %v1220 = vsel %vm40, %v1218, 0.0
  %v1221 = vsel %vm41, %v1217, 0.0
  %v1222 = vsel %vm42, %v1216, 0.0
  %v1223 = vsel %vm43, %v1219, 0.0
  %1224 = vst [vmem:[#allocation2 + $0xa0] sm:$0xff] %v1220
  %1225 = vst [vmem:[#allocation2 + $0xa8] sm:$0xff] %v1221
  %1226 = vst [vmem:[#allocation2 + $0xb0] sm:$0xff] %v1222
  %1227 = vst [vmem:[#allocation2 + $0xb8] sm:$0xff] %v1223
  %1228 = vrot.lane.b32.xlu0 %v1120, 112
  %v1229 = vpop.permute.xlu0 %1228
  %1230 = vrot.lane.b32.xlu0 %v1121, 112
  %v1231 = vpop.permute.xlu0 %1230
  %1232 = vrot.lane.b32.xlu0 %v1122, 112
  %v1233 = vpop.permute.xlu0 %1232
  %1234 = vrot.lane.b32.xlu0 %v1123, 112
  %v1235 = vpop.permute.xlu0 %1234
  %v1236 = vsel %vm168, %v1233, %v1235
  %v1237 = vsel %vm168, %v1231, %v1233
  %v1238 = vsel %vm168, %v1229, %v1231
  %v1239 = vsel %vm168, %v1235, %v1229
  %v1240 = vsel %vm32, %v1238, 0.0
  %v1241 = vsel %vm33, %v1237, 0.0
  %v1242 = vsel %vm34, %v1236, 0.0
  %v1243 = vsel %vm35, %v1239, 0.0
  %1244 = vrot.lane.b32.xlu0 %v1240, 1
  %v1245 = vpop.permute.xlu0 %1244
  %1246 = vrot.lane.b32.xlu0 %v1241, 1
  %v1247 = vpop.permute.xlu0 %1246
  %1248 = vrot.lane.b32.xlu0 %v1242, 1
  %v1249 = vpop.permute.xlu0 %1248
  %1250 = vrot.lane.b32.xlu0 %v1243, 1
  %v1251 = vpop.permute.xlu0 %1250
  %v1252 = vsel %vm78, %v1249, %v1251
  %v1253 = vsel %vm78, %v1247, %v1249
  %v1254 = vsel %vm78, %v1245, %v1247
  %v1255 = vsel %vm78, %v1251, %v1245
  %v1256 = vsel %vm36, %v1255, 0.0
  %v1257 = vsel %vm37, %v1254, 0.0
  %v1258 = vsel %vm38, %v1253, 0.0
  %v1259 = vsel %vm39, %v1252, 0.0
  %1260 = vst [vmem:[#allocation2 + $0xc0] sm:$0xff] %v1256
  %1261 = vst [vmem:[#allocation2 + $0xc8] sm:$0xff] %v1257
  %1262 = vst [vmem:[#allocation2 + $0xd0] sm:$0xff] %v1258
  %1263 = vst [vmem:[#allocation2 + $0xd8] sm:$0xff] %v1259
  %1264 = vst [vmem:[#allocation2 + $0xe0] sm:$0xff] %v1240
  %1265 = vst [vmem:[#allocation2 + $0xe8] sm:$0xff] %v1241
  %1266 = vst [vmem:[#allocation2 + $0xf0] sm:$0xff] %v1242
  %1267 = vst [vmem:[#allocation2 + $0xf8] sm:$0xff] %v1243
  %1268 = vrot.lane.b32.xlu0 %v1240, 127
  %v1269 = vpop.permute.xlu0 %1268
  %1270 = vrot.lane.b32.xlu0 %v1241, 127
  %v1271 = vpop.permute.xlu0 %1270
  %1272 = vrot.lane.b32.xlu0 %v1242, 127
  %v1273 = vpop.permute.xlu0 %1272
  %1274 = vrot.lane.b32.xlu0 %v1243, 127
  %v1275 = vpop.permute.xlu0 %1274
  %v1276 = vsel %vm103, %v1273, %v1275
  %v1277 = vsel %vm103, %v1271, %v1273
  %v1278 = vsel %vm103, %v1269, %v1271
  %v1279 = vsel %vm103, %v1275, %v1269
  %v1280 = vsel %vm40, %v1278, 0.0
  %v1281 = vsel %vm41, %v1277, 0.0
  %v1282 = vsel %vm42, %v1276, 0.0
  %v1283 = vsel %vm43, %v1279, 0.0
  %1284 = vst [vmem:[#allocation2 + $0x100] sm:$0xff] %v1280
  %1285 = vst [vmem:[#allocation2 + $0x108] sm:$0xff] %v1281
  %1286 = vst [vmem:[#allocation2 + $0x110] sm:$0xff] %v1282
  %1287 = vst [vmem:[#allocation2 + $0x118] sm:$0xff] %v1283
  %v1288 = vld [vmem:[%s1 + $0x18] sm:$0xff]
  %v1289 = vld [vmem:[#allocation2] sm:$0xff]
  %v1290 = vld [vmem:[#allocation2 + $0x8] sm:$0xff]
  %v1291 = vld [vmem:[#allocation2 + $0x10] sm:$0xff]
  %v1292 = vld [vmem:[#allocation2 + $0x18] sm:$0xff]
  %v1293 = vld [vmem:[#allocation2 + $0x20] sm:$0xff]
  %v1294 = vld [vmem:[#allocation2 + $0x28] sm:$0xff]
  %v1295 = vld [vmem:[#allocation2 + $0x30] sm:$0xff]
  %v1296 = vld [vmem:[#allocation2 + $0x38] sm:$0xff]
  %v1297 = vld [vmem:[#allocation2 + $0x40] sm:$0xff]
  %v1298 = vld [vmem:[#allocation2 + $0x48] sm:$0xff]
  %v1299 = vld [vmem:[#allocation2 + $0x50] sm:$0xff]
  %v1300 = vld [vmem:[#allocation2 + $0x58] sm:$0xff]
  %v1301 = vld [vmem:[#allocation2 + $0x60] sm:$0xff]
  %v1302 = vld [vmem:[#allocation2 + $0x68] sm:$0xff]
  %v1303 = vld [vmem:[#allocation2 + $0x70] sm:$0xff]
  %v1304 = vld [vmem:[#allocation2 + $0x78] sm:$0xff]
  %v1305 = vld [vmem:[#allocation2 + $0x80] sm:$0xff]
  %v1306 = vld [vmem:[#allocation2 + $0x88] sm:$0xff]
  %v1307 = vld [vmem:[#allocation2 + $0x90] sm:$0xff]
  %v1308 = vld [vmem:[#allocation2 + $0x98] sm:$0xff]
  %v1309 = vld [vmem:[#allocation2 + $0xa0] sm:$0xff]
  %v1310 = vld [vmem:[#allocation2 + $0xa8] sm:$0xff]
  %v1311 = vld [vmem:[#allocation2 + $0xb0] sm:$0xff]
  %v1312 = vld [vmem:[#allocation2 + $0xb8] sm:$0xff]
  %v1313 = vld [vmem:[#allocation2 + $0xc0] sm:$0xff]
  %v1314 = vld [vmem:[#allocation2 + $0xc8] sm:$0xff]
  %v1315 = vld [vmem:[#allocation2 + $0xd0] sm:$0xff]
  %v1316 = vld [vmem:[#allocation2 + $0xd8] sm:$0xff]
  %v1317 = vld [vmem:[#allocation2 + $0xe0] sm:$0xff]
  %v1318 = vld [vmem:[#allocation2 + $0xe8] sm:$0xff]
  %v1319 = vld [vmem:[#allocation2 + $0xf0] sm:$0xff]
  %v1320 = vld [vmem:[#allocation2 + $0xf8] sm:$0xff]
  %v1321 = vld [vmem:[#allocation2 + $0x100] sm:$0xff]
  %v1322 = vld [vmem:[#allocation2 + $0x108] sm:$0xff]
  %v1323 = vld [vmem:[#allocation2 + $0x110] sm:$0xff]
  %v1324 = vld [vmem:[#allocation2 + $0x118] sm:$0xff]
  %v1325 = vld [vmem:[#allocation2 + $0x120] sm:$0xff]
  %v1326 = vld [vmem:[#allocation2 + $0x128] sm:$0xff]
  %v1327 = vld [vmem:[#allocation2 + $0x130] sm:$0xff]
  %v1328 = vld [vmem:[#allocation2 + $0x138] sm:$0xff]
  %v1330 = vsel %vm262, %v1288, 0
  %1332 = vmatprep.subr.mxu0 %v1290
  %1333 = vmatpush1.msra.mxu0 %v1289
  %1334 = vmatprep.subr.mxu0 %v1294
  %1335 = vmatpush1.msra.mxu0 %v1293
  %1336 = vmatprep.subr.mxu0 %v1298
  %1337 = vmatpush1.msra.mxu0 %v1297
  %1338 = vmatprep.subr.mxu0 %v1302
  %1339 = vmatpush1.msra.mxu0 %v1301
  %1340 = vmatprep.subr.mxu0 %v1306
  %1341 = vmatpush1.msra.mxu0 %v1305
  %1342 = vmatprep.subr.mxu0 %v1310
  %1343 = vmatpush1.msra.mxu0 %v1309
  %1344 = vmatprep.subr.mxu0 %v1314
  %1345 = vmatpush1.msra.mxu0 %v1313
  %1346 = vmatprep.subr.mxu0 %v1318
  %1347 = vmatpush1.msra.mxu0 %v1317
  %1348 = vmatprep.subr.mxu0 %v1322
  %1349 = vmatpush1.msra.mxu0 %v1321
  %1350 = vmatprep.subr.mxu0 %v1326
  %1351 = vmatpush1.msra.mxu0 %v1325
  %1352 = vmatprep.subr.mxu0 0.0
  %1353 = vmatpush1.msra.mxu0 0.0
  %1354 = vmatprep.subr.mxu0 0.0
  %1355 = vmatpush1.msra.mxu0 0.0
  %1356 = vmatprep.subr.mxu0 0.0
  %1357 = vmatpush1.msra.mxu0 0.0
  %1358 = vmatprep.subr.mxu0 0.0
  %1359 = vmatpush1.msra.mxu0 0.0
  %1360 = vmatprep.subr.mxu0 0.0
  %1361 = vmatpush1.msra.mxu0 0.0
  %1362 = vmatprep.subr.mxu0 0.0
  %1363 = vmatpush1.msra.mxu0 0.0
  %1364 = vmatprep.subr.mxu0 0.0
  %1365 = vmatpush1.msra.mxu0 0.0
  %1366 = vmatprep.subr.mxu0 0.0
  %1367 = vmatpush1.msra.mxu0 0.0
  %1368 = vmatprep.subr.mxu0 0.0
  %1369 = vmatpush1.msra.mxu0 0.0
  %1370 = vmatprep.subr.mxu0 0.0
  %1371 = vmatpush1.msra.mxu0 0.0
  %1372 = vmatprep.subr.mxu0 0.0
  %1373 = vmatpush1.msra.mxu0 0.0
  %1374 = vmatprep.subr.mxu0 0.0
  %1375 = vmatpush1.msra.mxu0 0.0
  %1376 = vmatprep.subr.mxu0 0.0
  %1377 = vmatpush1.msra.mxu0 0.0
  %1378 = vmatprep.subr.mxu0 0.0
  %1379 = vmatpush1.msra.mxu0 0.0
  %1380 = vmatprep.subr.mxu0 0.0
  %1381 = vmatpush1.msra.mxu0 0.0
  %1382 = vmatprep.subr.mxu0 0.0
  %1383 = vmatpush1.msra.mxu0 0.0
  %1384 = vmatprep.subr.mxu0 0.0
  %1385 = vmatpush1.msra.mxu0 0.0
  %1386 = vmatprep.subr.mxu0 0.0
  %1387 = vmatpush1.msra.mxu0 0.0
  %1388 = vmatprep.subr.mxu0 0.0
  %1389 = vmatpush1.msra.mxu0 0.0
  %1390 = vmatprep.subr.mxu0 0.0
  %1391 = vmatpush1.msra.mxu0 0.0
  %1392 = vmatprep.subr.mxu0 0.0
  %1393 = vmatpush1.msra.mxu0 0.0
  %1394 = vmatprep.subr.mxu0 0.0
  %1395 = vmatpush1.msra.mxu0 0.0
  %1396 = vmatprep.mubr.f32.mxu0 0.0
  %1397 = vmatmul.mubr.f32.gmra.mrb[0].mxu0 %v1330
  %v1398 = vpop.f32.mrb[0].mxu0
  %v1399 = vadd.f32 0.0, %v1398
  %v1400 = vpop.f32.mrb[0].mxu0
  %v1401 = vadd.f32 0.0, %v1400
  %1402 = vdwg.mxu0
  %1403 = vmatprep.subr.mxu0 %v1292
  %1404 = vmatpush1.msra.mxu0 %v1291
  %1405 = vmatprep.subr.mxu0 %v1296
  %1406 = vmatpush1.msra.mxu0 %v1295
  %1407 = vmatprep.subr.mxu0 %v1300
  %1408 = vmatpush1.msra.mxu0 %v1299
  %1409 = vmatprep.subr.mxu0 %v1304
  %1410 = vmatpush1.msra.mxu0 %v1303
  %1411 = vmatprep.subr.mxu0 %v1308
  %1412 = vmatpush1.msra.mxu0 %v1307
  %1413 = vmatprep.subr.mxu0 %v1312
  %1414 = vmatpush1.msra.mxu0 %v1311
  %1415 = vmatprep.subr.mxu0 %v1316
  %1416 = vmatpush1.msra.mxu0 %v1315
  %1417 = vmatprep.subr.mxu0 %v1320
  %1418 = vmatpush1.msra.mxu0 %v1319
  %1419 = vmatprep.subr.mxu0 %v1324
  %1420 = vmatpush1.msra.mxu0 %v1323
  %1421 = vmatprep.subr.mxu0 %v1328
  %1422 = vmatpush1.msra.mxu0 %v1327
  %1423 = vmatprep.subr.mxu0 0.0
  %1424 = vmatpush1.msra.mxu0 0.0
  %1425 = vmatprep.subr.mxu0 0.0
  %1426 = vmatpush1.msra.mxu0 0.0
  %1427 = vmatprep.subr.mxu0 0.0
  %1428 = vmatpush1.msra.mxu0 0.0
  %1429 = vmatprep.subr.mxu0 0.0
  %1430 = vmatpush1.msra.mxu0 0.0
  %1431 = vmatprep.subr.mxu0 0.0
  %1432 = vmatpush1.msra.mxu0 0.0
  %1433 = vmatprep.subr.mxu0 0.0
  %1434 = vmatpush1.msra.mxu0 0.0
  %1435 = vmatprep.subr.mxu0 0.0
  %1436 = vmatpush1.msra.mxu0 0.0
  %1437 = vmatprep.subr.mxu0 0.0
  %1438 = vmatpush1.msra.mxu0 0.0
  %1439 = vmatprep.subr.mxu0 0.0
  %1440 = vmatpush1.msra.mxu0 0.0
  %1441 = vmatprep.subr.mxu0 0.0
  %1442 = vmatpush1.msra.mxu0 0.0
  %1443 = vmatprep.subr.mxu0 0.0
  %1444 = vmatpush1.msra.mxu0 0.0
  %1445 = vmatprep.subr.mxu0 0.0
  %1446 = vmatpush1.msra.mxu0 0.0
  %1447 = vmatprep.subr.mxu0 0.0
  %1448 = vmatpush1.msra.mxu0 0.0
  %1449 = vmatprep.subr.mxu0 0.0
  %1450 = vmatpush1.msra.mxu0 0.0
  %1451 = vmatprep.subr.mxu0 0.0
  %1452 = vmatpush1.msra.mxu0 0.0
  %1453 = vmatprep.subr.mxu0 0.0
  %1454 = vmatpush1.msra.mxu0 0.0
  %1455 = vmatprep.subr.mxu0 0.0
  %1456 = vmatpush1.msra.mxu0 0.0
  %1457 = vmatprep.subr.mxu0 0.0
  %1458 = vmatpush1.msra.mxu0 0.0
  %1459 = vmatprep.subr.mxu0 0.0
  %1460 = vmatpush1.msra.mxu0 0.0
  %1461 = vmatprep.subr.mxu0 0.0
  %1462 = vmatpush1.msra.mxu0 0.0
  %1463 = vmatprep.subr.mxu0 0.0
  %1464 = vmatpush1.msra.mxu0 0.0
  %1465 = vmatprep.subr.mxu0 0.0
  %1466 = vmatpush1.msra.mxu0 0.0
  %1467 = vmatprep.mubr.f32.mxu0 0.0
  %1468 = vmatmul.mubr.f32.gmra.mrb[0].mxu0 %v1330
  %v1469 = vpop.f32.mrb[0].mxu0
  %v1470 = vadd.f32 0.0, %v1469
  %v1471 = vpop.f32.mrb[0].mxu0
  %v1472 = vadd.f32 0.0, %v1471
  %1473 = vdwg.mxu0
  %v1474 = vadd.f32 %v766, %v1399
  %v1475 = vadd.f32 %v767, %v1401
  %v1476 = vadd.f32 %v768, %v1470
  %v1477 = vadd.f32 %v769, %v1472
  %v1478 = vmax.f32 %v1474, 0.0
  %v1479 = vmax.f32 %v1475, 0.0
  %v1480 = vmax.f32 %v1476, 0.0
  %v1481 = vmax.f32 %v1477, 0.0
  %1482 = vst [vmem:[%s2] sm:$0xff] %v1478
  %1483 = vst [vmem:[%s2 + $0x8] sm:$0xff] %v1479
  %1484 = vst [vmem:[%s2 + $0x10] sm:$0xff] %v1480
  %1485 = vst [vmem:[%s2 + $0x18] sm:$0xff] %v1481
  // Predicated region
  $region10: #{res_truck_forward.1} parent=0 // pred_check
    _
  $region11: #{res_truck_forward.1} parent=0 // pred_check_branch
    %1487 = sbr.rel (0) target = $region13
  $region12: #{res_truck_forward.1} parent=0 // pred_region
    _
  $region13: #{res_truck_forward.1} parent=0 // pred_fallthru
    _
  // Predicated region
  $region14: #{res_truck_forward.1} parent=0 // pred_check
    _
  $region15: #{res_truck_forward.1} parent=0 // pred_check_branch
    %1489 = sbr.rel (0) target = $region17
  $region16: #{res_truck_forward.1} parent=0 // pred_region
    _
  $region17: #{res_truck_forward.1} parent=0 // pred_fallthru
    _

</llo_original>
